<compile_context>
chip_gen: v5e
topology: v5e:2x2
jax: 0.10.0
libtpu: 0.0.40
codegen_flags: <defaults>
</compile_context>

<pallas_src>
import jax
import jax.numpy as jnp
import numpy as np
from jax import lax
from jax.experimental import pallas as pl
from jax.experimental.pallas import tpu as pltpu


def _make_kernel(num_layers, t_chunk, b_tile, hidden, compute_dtype):
    H = hidden

    if t_chunk <= 16:
        unroll = True
    else:
        unroll = max(u for u in (8, 4, 2, 1) if t_chunk % u == 0)

    def kernel(maxlen_ref, len_ref, xp_ref, *rest):
        # rest = [w_hh0, (w_fused_l, b_l) for l>=1, out_ref, h_scr, c_scr]
        n_w = 1 + 2 * (num_layers - 1)
        w_refs = rest[:n_w]
        out_ref = rest[n_w]
        h_scr = rest[n_w + 1]
        c_scr = rest[n_w + 2]

        bt = pl.program_id(0)
        tc = pl.program_id(1)
        t0 = tc * t_chunk

        @pl.when(tc == 0)
        def _():
            h_scr[...] = jnp.zeros_like(h_scr)
            c_scr[...] = jnp.zeros_like(c_scr)

        # Skip whole T chunks once every sequence in this batch tile has ended
        # (pack_padded_sequence semantics: state is frozen past each length, so
        # skipping is exactly equivalent and saves the per-step MXU chain).
        @pl.when(t0 < maxlen_ref[bt])
        def _():
            lengths = len_ref[...]                              # (b_tile, 1) i32
            w_hh0 = w_refs[0][...]                              # (H, 4H)
            w_fused = [w_refs[1 + 2 * (l - 1)][...]             # (2H, 4H)
                       for l in range(1, num_layers)]
            # Hoisted: one bias broadcast per grid step, not per timestep.
            biases = [jnp.broadcast_to(w_refs[2 + 2 * (l - 1)][...],
                                       (b_tile, 4 * H))
                      for l in range(1, num_layers)]

            def lstm_cell(gates, c_prev):
                # TODO(synk): H=32 gate slices are 32-lane extracts; for
                # production sizes make H a multiple of 128 so these are free.
                i_g = jax.nn.sigmoid(gates[:, 0 * H:1 * H])
                f_g = jax.nn.sigmoid(gates[:, 1 * H:2 * H])
                g_g = jnp.tanh(gates[:, 2 * H:3 * H])
                o_g = jax.nn.sigmoid(gates[:, 3 * H:4 * H])
                c_new = f_g * c_prev + i_g * g_g
                h_new = o_g * jnp.tanh(c_new)
                return h_new, c_new

            def step(s, carry):
                t = t0 + s
                # Freeze state past each sequence's length so h_n equals the
                # hidden state at the last valid step.  One broadcast per step,
                # shared by every layer's selects.
                valid = jnp.broadcast_to(t < lengths, (b_tile, H))

                new_carry = []
                # ---- layer 0: input projection precomputed -> one MXU push.
                h_prev, c_prev = carry[0], carry[1]
                gates = (xp_ref[s].astype(jnp.float32)
                         + jnp.dot(h_prev.astype(compute_dtype), w_hh0,
                                   preferred_element_type=jnp.float32))
                h_new, c_new = lstm_cell(gates, c_prev)
                h_l = jnp.where(valid, h_new, h_prev)
                c_l = jnp.where(valid, c_new, c_prev)
                new_carry += [h_l, c_l]
                inp = h_l

                # ---- layers >= 1: fused [x, h] @ [W_ih; W_hh] -> one push.
                for l in range(1, num_layers):
                    h_prev, c_prev = carry[2 * l], carry[2 * l + 1]
                    hcat = jnp.concatenate([inp, h_prev],
                                           axis=1).astype(compute_dtype)
                    gates = (jnp.dot(hcat, w_fused[l - 1],
                                     preferred_element_type=jnp.float32)
                             + biases[l - 1])
                    h_new, c_new = lstm_cell(gates, c_prev)
                    h_l = jnp.where(valid, h_new, h_prev)
                    c_l = jnp.where(valid, c_new, c_prev)
                    new_carry += [h_l, c_l]
                    inp = h_l
                return tuple(new_carry)

            init = []
            for l in range(num_layers):
                init += [h_scr[l], c_scr[l]]

            final = lax.fori_loop(0, t_chunk, step, tuple(init), unroll=unroll)

            # Carry h/c to the next T chunk via resident VMEM scratch.
            for l in range(num_layers):
                h_scr[l] = final[2 * l]
                c_scr[l] = final[2 * l + 1]

        @pl.when(tc == pl.num_programs(1) - 1)
        def _():
            out_ref[...] = h_scr[...]

    return kernel


def init_params(key, vocab_size, embedding_dim, hidden_size, num_layers):
    """Deterministic synthetic parameters matching nn.Embedding + nn.LSTM shapes."""
    params = {}
    k = key

    def nxt():
        nonlocal k
        k, sub = jax.random.split(k)
        return sub

    scale = 1.0 / np.sqrt(hidden_size)
    params["embedding"] = jax.random.normal(
        nxt(), (vocab_size, embedding_dim), jnp.float32)
    for l in range(num_layers):
        in_dim = embedding_dim if l == 0 else hidden_size
        params[f"w_ih_{l}"] = jax.random.uniform(
            nxt(), (in_dim, 4 * hidden_size), jnp.float32, -scale, scale)
        params[f"w_hh_{l}"] = jax.random.uniform(
            nxt(), (hidden_size, 4 * hidden_size), jnp.float32, -scale, scale)
        b_ih = jax.random.uniform(
            nxt(), (4 * hidden_size,), jnp.float32, -scale, scale)
        b_hh = jax.random.uniform(
            nxt(), (4 * hidden_size,), jnp.float32, -scale, scale)
        params[f"b_{l}"] = (b_ih + b_hh).reshape(1, 4 * hidden_size)
    return params


def aptamer_lstm_forward(smiles, lengths, params, *, vocab_size, embedding_dim,
                         hidden_size, num_layers,
                         compute_dtype=jnp.bfloat16, t_chunk=None, b_tile=None):
    """Equivalent of AptamerLSTM.forward((smiles, lengths))."""
    del vocab_size, embedding_dim  # implied by params
    B, T = smiles.shape
    H = hidden_size

    # Fold embedding + layer-0 input projection + layer-0 bias into one table:
    #   x_proj[t, b] = emb[smiles[b, t]] @ W_ih0 + b0 == table0[smiles[b, t]]
    # This removes 2 of the serial per-timestep MXU pushes from the recurrence.
    table0 = params["embedding"] @ params["w_ih_0"] + params["b_0"]   # (V, 4H)
    x_proj = jnp.transpose(table0[smiles], (1, 0, 2))                 # (T, B, 4H)

    if t_chunk is None:
        t_chunk = T if T <= 8 else 8
    t_pad = -(-T // t_chunk) * t_chunk
    if t_pad != T:
        # Zero-pad time; padded steps are discarded by the length mask.
        x_proj = jnp.pad(x_proj, ((0, t_pad - T), (0, 0), (0, 0)))
    x_proj = x_proj.astype(compute_dtype)

    if b_tile is None:
        b_tile = B
    assert B % b_tile == 0 and (b_tile == B or b_tile % 8 == 0)
    num_b_tiles = B // b_tile

    lengths_i32 = lengths.astype(jnp.int32)
    len2d = lengths_i32.reshape(B, 1)
    # Scalar-prefetched per-batch-tile max length -> SMEM, used to skip whole
    # T chunks once every sequence in the tile is finished.
    maxlen_per_tile = jnp.max(lengths_i32.reshape(num_b_tiles, b_tile), axis=1)

    args = [maxlen_per_tile, len2d, x_proj,
            params["w_hh_0"].astype(compute_dtype)]
    in_specs = [
        pl.BlockSpec((b_tile, 1), lambda bt, tc, ml: (bt, 0)),
        pl.BlockSpec((t_chunk, b_tile, 4 * H), lambda bt, tc, ml: (tc, bt, 0)),
        pl.BlockSpec((H, 4 * H), lambda bt, tc, ml: (0, 0)),
    ]
    for l in range(1, num_layers):
        w_fused = jnp.concatenate(
            [params[f"w_ih_{l}"], params[f"w_hh_{l}"]], axis=0)       # (2H, 4H)
        args.append(w_fused.astype(compute_dtype))
        in_specs.append(pl.BlockSpec((2 * H, 4 * H), lambda bt, tc, ml: (0, 0)))
        args.append(params[f"b_{l}"])                                 # (1, 4H)
        in_specs.append(pl.BlockSpec((1, 4 * H), lambda bt, tc, ml: (0, 0)))

    grid = (num_b_tiles, t_pad // t_chunk)

    h_n = pl.pallas_call(
        _make_kernel(num_layers, t_chunk, b_tile, H, compute_dtype),
        out_shape=jax.ShapeDtypeStruct((num_layers, B, H), jnp.float32),
        grid_spec=pltpu.PrefetchScalarGridSpec(
            num_scalar_prefetch=1,
            grid=grid,
            in_specs=in_specs,
            out_specs=pl.BlockSpec((num_layers, b_tile, H),
                                   lambda bt, tc, ml: (0, bt, 0)),
            scratch_shapes=[pltpu.VMEM((num_layers, b_tile, H), jnp.float32),
                            pltpu.VMEM((num_layers, b_tile, H), jnp.float32)]),
        compiler_params=pltpu.CompilerParams(
            # Batch tiles shard across TensorCores (megacore); the T-chunk axis
            # carries the resident h/c scratch so it must stay serial.
            dimension_semantics=("parallel", "arbitrary"),
            # Stay well under v7x's 64 MiB/TC; raises v5e's 16 MiB default.
            vmem_limit_bytes=32 * 1024 * 1024),
    )(*args)

    # Matches PyTorch: h_n.view(-1, layers * hidden_size) (raw row-major reshape)
    return jnp.reshape(h_n, (-1, num_layers * H))


def reference_forward(smiles, lengths, params, *, hidden_size, num_layers):
    """Pure-JAX reference (same math, no Pallas) for correctness checking."""
    B, T = smiles.shape
    H = hidden_size
    emb = params["embedding"][smiles]                 # (B, T, E)
    x = jnp.transpose(emb, (1, 0, 2))                 # (T, B, E)
    h = [jnp.zeros((B, H), jnp.float32) for _ in range(num_layers)]
    c = [jnp.zeros((B, H), jnp.float32) for _ in range(num_layers)]
    for t in range(T):
        valid = (t < lengths)[:, None]
        inp = x[t]
        for l in range(num_layers):
            gates = (inp @ params[f"w_ih_{l}"] + h[l] @ params[f"w_hh_{l}"]
                     + params[f"b_{l}"])
            i_g = jax.nn.sigmoid(gates[:, :H])
            f_g = jax.nn.sigmoid(gates[:, H:2 * H])
            g_g = jnp.tanh(gates[:, 2 * H:3 * H])
            o_g = jax.nn.sigmoid(gates[:, 3 * H:])
            c_new = f_g * c[l] + i_g * g_g
            h_new = o_g * jnp.tanh(c_new)
            h[l] = jnp.where(valid, h_new, h[l])
            c[l] = jnp.where(valid, c_new, c[l])
            inp = h[l]
    h_n = jnp.stack(h, axis=0)
    return jnp.reshape(h_n, (-1, num_layers * H))


if __name__ == "__main__":
    B, T = 8, 8                     # batch, padded sequence length
    VOCAB, E, H, L = 4, 16, 32, 2   # vocab, embedding_dim, hidden_size, layers

    key = jax.random.PRNGKey(0)
    k_tok, k_par = jax.random.split(key)
    smiles = jax.random.randint(k_tok, (B, T), 0, VOCAB, dtype=jnp.int32)
    lengths = jnp.array([8, 5, 3, 8, 2, 6, 7, 4], dtype=jnp.int32)
    params = init_params(k_par, VOCAB, E, H, L)

    ref = reference_forward(smiles, lengths, params, hidden_size=H,
                            num_layers=L)

    # f32 path: strict semantics check against the pure-JAX reference.
    out_f32 = aptamer_lstm_forward(
        smiles, lengths, params, vocab_size=VOCAB, embedding_dim=E,
        hidden_size=H, num_layers=L, compute_dtype=jnp.float32, t_chunk=4)
    out_f32 = jax.block_until_ready(out_f32)
    assert out_f32.shape == (B, L * H)
    assert float(jnp.max(jnp.abs(out_f32 - ref))) < 1e-3

    # bf16 weights / streamed gate inputs (f32 state + f32 MXU accumulation):
    # the high-rate MXU path on v6e/v7x; looser tolerance for bf16 rounding.
    out_bf16 = aptamer_lstm_forward(
        smiles, lengths, params, vocab_size=VOCAB, embedding_dim=E,
        hidden_size=H, num_layers=L, compute_dtype=jnp.bfloat16, t_chunk=4)
    out_bf16 = jax.block_until_ready(out_bf16)
    assert out_bf16.shape == (B, L * H)
    assert float(jnp.max(jnp.abs(out_bf16 - ref))) < 3e-2

    print("KERNEL_OK")
</pallas_src>

<mosaic_0001>
module attributes {stable_mosaic.version = 11 : i64} {
  func.func @kernel(%arg0: i32, %arg1: i32, %arg2: memref<1xi32, #tpu.memory_space<smem>>, %arg3: memref<8x1xi32, #tpu.memory_space<vmem>>, %arg4: memref<4x8x128xf32, #tpu.memory_space<vmem>>, %arg5: memref<32x128xf32, #tpu.memory_space<vmem>>, %arg6: memref<64x128xf32, #tpu.memory_space<vmem>>, %arg7: memref<1x128xf32, #tpu.memory_space<vmem>>, %arg8: memref<2x8x32xf32, #tpu.memory_space<vmem>>, %arg9: memref<2x8x32xf32, #tpu.memory_space<vmem>>, %arg10: memref<2x8x32xf32, #tpu.memory_space<vmem>>) attributes {dimension_semantics = [#tpu.dimension_semantics<parallel>, #tpu.dimension_semantics<arbitrary>], iteration_bounds = array<i64: 1, 2>, scalar_prefetch = 1 : i64, scratch_operands = 2 : i64, tpu.core_type = #tpu.core_type<tc>, window_params = [{transform_indices = @transform_0, window_bounds = array<i64: 8, 1>}, {transform_indices = @transform_1, window_bounds = array<i64: 4, 8, 128>}, {pipeline_mode = #tpu.pipeline_mode<synchronous>, transform_indices = @transform_2, window_bounds = array<i64: 32, 128>}, {pipeline_mode = #tpu.pipeline_mode<synchronous>, transform_indices = @transform_3, window_bounds = array<i64: 64, 128>}, {pipeline_mode = #tpu.pipeline_mode<synchronous>, transform_indices = @transform_4, window_bounds = array<i64: 1, 128>}, {transform_indices = @transform_5, window_bounds = array<i64: 2, 8, 32>}]} {
    %c4_i32 = arith.constant 4 : i32
    %0 = arith.muli %arg1, %c4_i32 : i32
    %c0_i32 = arith.constant 0 : i32
    %1 = arith.cmpi eq, %arg1, %c0_i32 : i32
    %2 = arith.extui %1 : i1 to i32
    %c0_i32_0 = arith.constant 0 : i32
    %3 = arith.cmpi ne, %2, %c0_i32_0 : i32
    scf.if %3 {
      %cst = arith.constant 0.000000e+00 : f32
      %12 = vector.broadcast %cst : f32 to vector<2x8x32xf32>
      %c0 = arith.constant 0 : index
      %c0_3 = arith.constant 0 : index
      %c0_4 = arith.constant 0 : index
      %13 = vector.load %arg9[%c0, %c0_3, %c0_4] : memref<2x8x32xf32, #tpu.memory_space<vmem>>, vector<2x8x32xf32>
      tpu.vector_store %arg9[%c0, %c0_3, %c0_4], %12 {strides = array<i32>} : memref<2x8x32xf32, #tpu.memory_space<vmem>>, vector<2x8x32xf32>,
      %cst_5 = arith.constant 0.000000e+00 : f32
      %14 = vector.broadcast %cst_5 : f32 to vector<2x8x32xf32>
      %c0_6 = arith.constant 0 : index
      %c0_7 = arith.constant 0 : index
      %c0_8 = arith.constant 0 : index
      %15 = vector.load %arg10[%c0_6, %c0_7, %c0_8] : memref<2x8x32xf32, #tpu.memory_space<vmem>>, vector<2x8x32xf32>
      tpu.vector_store %arg10[%c0_6, %c0_7, %c0_8], %14 {strides = array<i32>} : memref<2x8x32xf32, #tpu.memory_space<vmem>>, vector<2x8x32xf32>,
    } else {
    }
    %4 = arith.index_cast %arg0 : i32 to index
    %5 = memref.load %arg2[%4] : memref<1xi32, #tpu.memory_space<smem>>
    %6 = arith.cmpi slt, %0, %5 : i32
    %7 = arith.extui %6 : i1 to i32
    %c0_i32_1 = arith.constant 0 : i32
    %8 = arith.cmpi ne, %7, %c0_i32_1 : i32
    scf.if %8 {
      %c0 = arith.constant 0 : index
      %c0_3 = arith.constant 0 : index
      %12 = vector.load %arg3[%c0, %c0_3] : memref<8x1xi32, #tpu.memory_space<vmem>>, vector<8x1xi32>
      %c0_4 = arith.constant 0 : index
      %c0_5 = arith.constant 0 : index
      %13 = vector.load %arg5[%c0_4, %c0_5] : memref<32x128xf32, #tpu.memory_space<vmem>>, vector<32x128xf32>
      %c0_6 = arith.constant 0 : index
      %c0_7 = arith.constant 0 : index
      %14 = vector.load %arg6[%c0_6, %c0_7] : memref<64x128xf32, #tpu.memory_space<vmem>>, vector<64x128xf32>
      %c0_8 = arith.constant 0 : index
      %c0_9 = arith.constant 0 : index
      %15 = vector.load %arg7[%c0_8, %c0_9] : memref<1x128xf32, #tpu.memory_space<vmem>>, vector<1x128xf32>
      %16 = vector.shape_cast %15 : vector<1x128xf32> to vector<1x128xf32>
      %17 = vector.broadcast %16 : vector<1x128xf32> to vector<8x128xf32>
      %c0_10 = arith.constant 0 : index
      %c0_11 = arith.constant 0 : index
      %c0_12 = arith.constant 0 : index
      %18 = vector.load %arg9[%c0_10, %c0_11, %c0_12] : memref<2x8x32xf32, #tpu.memory_space<vmem>>, vector<1x8x32xf32>
      %19 = vector.shape_cast %18 : vector<1x8x32xf32> to vector<8x32xf32>
      %c0_13 = arith.constant 0 : index
      %c0_14 = arith.constant 0 : index
      %c0_15 = arith.constant 0 : index
      %20 = vector.load %arg10[%c0_13, %c0_14, %c0_15] : memref<2x8x32xf32, #tpu.memory_space<vmem>>, vector<1x8x32xf32>
      %21 = vector.shape_cast %20 : vector<1x8x32xf32> to vector<8x32xf32>
      %c1 = arith.constant 1 : index
      %c0_16 = arith.constant 0 : index
      %c0_17 = arith.constant 0 : index
      %22 = vector.load %arg9[%c1, %c0_16, %c0_17] : memref<2x8x32xf32, #tpu.memory_space<vmem>>, vector<1x8x32xf32>
      %23 = vector.shape_cast %22 : vector<1x8x32xf32> to vector<8x32xf32>
      %c1_18 = arith.constant 1 : index
      %c0_19 = arith.constant 0 : index
      %c0_20 = arith.constant 0 : index
      %24 = vector.load %arg10[%c1_18, %c0_19, %c0_20] : memref<2x8x32xf32, #tpu.memory_space<vmem>>, vector<1x8x32xf32>
      %25 = vector.shape_cast %24 : vector<1x8x32xf32> to vector<8x32xf32>
      %c0_i32_21 = arith.constant 0 : i32
      %26 = arith.addi %0, %c0_i32_21 : i32
      %27 = vector.broadcast %26 : i32 to vector<8x1xi32>
      %28 = arith.cmpi slt, %27, %12 : vector<8x1xi32>
      %29 = vector.shape_cast %28 : vector<8x1xi1> to vector<8x1xi1>
      %30 = vector.broadcast %29 : vector<8x1xi1> to vector<8x32xi1>
      %31 = arith.index_cast %c0_i32_21 : i32 to index
      %c0_22 = arith.constant 0 : index
      %c0_23 = arith.constant 0 : index
      %32 = vector.load %arg4[%31, %c0_22, %c0_23] : memref<4x8x128xf32, #tpu.memory_space<vmem>>, vector<1x8x128xf32>
      %33 = vector.shape_cast %32 : vector<1x8x128xf32> to vector<8x128xf32>
      %cst = arith.constant dense<0.000000e+00> : vector<8x128xf32>
      %34 = tpu.matmul %19, %13, %cst {dimension_numbers = #tpu.dot_dimension_numbers<[1], [0], [0], [1], [0, 0, 1, 1], [], []>} : vector<8x32xf32>, vector<32x128xf32>, vector<8x128xf32> -> vector<8x128xf32>
      %35 = arith.addf %33, %34 : vector<8x128xf32>
      %36 = vector.extract_strided_slice %35 {offsets = [0, 0], sizes = [8, 32], strides = [1, 1]} : vector<8x128xf32> to vector<8x32xf32>
      %37 = arith.negf %36 : vector<8x32xf32>
      %38 = math.exp %37 : vector<8x32xf32>
      %cst_24 = arith.constant 1.000000e+00 : f32
      %39 = vector.broadcast %cst_24 : f32 to vector<8x32xf32>
      %40 = arith.addf %39, %38 : vector<8x32xf32>
      %41 = arith.divf %39, %40 : vector<8x32xf32>
      %42 = vector.extract_strided_slice %35 {offsets = [0, 32], sizes = [8, 32], strides = [1, 1]} : vector<8x128xf32> to vector<8x32xf32>
      %43 = arith.negf %42 : vector<8x32xf32>
      %44 = math.exp %43 : vector<8x32xf32>
      %cst_25 = arith.constant 1.000000e+00 : f32
      %45 = vector.broadcast %cst_25 : f32 to vector<8x32xf32>
      %46 = arith.addf %45, %44 : vector<8x32xf32>
      %47 = arith.divf %45, %46 : vector<8x32xf32>
      %48 = vector.extract_strided_slice %35 {offsets = [0, 64], sizes = [8, 32], strides = [1, 1]} : vector<8x128xf32> to vector<8x32xf32>
      %49 = math.tanh %48 : vector<8x32xf32>
      %50 = vector.extract_strided_slice %35 {offsets = [0, 96], sizes = [8, 32], strides = [1, 1]} : vector<8x128xf32> to vector<8x32xf32>
      %51 = arith.negf %50 : vector<8x32xf32>
      %52 = math.exp %51 : vector<8x32xf32>
      %cst_26 = arith.constant 1.000000e+00 : f32
      %53 = vector.broadcast %cst_26 : f32 to vector<8x32xf32>
      %54 = arith.addf %53, %52 : vector<8x32xf32>
      %55 = arith.divf %53, %54 : vector<8x32xf32>
      %56 = arith.mulf %47, %21 : vector<8x32xf32>
      %57 = arith.mulf %41, %49 : vector<8x32xf32>
      %58 = arith.addf %56, %57 : vector<8x32xf32>
      %59 = math.tanh %58 : vector<8x32xf32>
      %60 = arith.mulf %55, %59 : vector<8x32xf32>
      %61 = arith.select %30, %60, %19 : vector<8x32xi1>, vector<8x32xf32>
      %62 = arith.select %30, %58, %21 : vector<8x32xi1>, vector<8x32xf32>
      %63 = tpu.concatenate %61, %23 in 1 : vector<8x32xf32>, vector<8x32xf32> -> vector<8x64xf32>
      %cst_27 = arith.constant dense<0.000000e+00> : vector<8x128xf32>
      %64 = tpu.matmul %63, %14, %cst_27 {dimension_numbers = #tpu.dot_dimension_numbers<[1], [0], [0], [1], [0, 0, 1, 1], [], []>} : vector<8x64xf32>, vector<64x128xf32>, vector<8x128xf32> -> vector<8x128xf32>
      %65 = arith.addf %64, %17 : vector<8x128xf32>
      %66 = vector.extract_strided_slice %65 {offsets = [0, 0], sizes = [8, 32], strides = [1, 1]} : vector<8x128xf32> to vector<8x32xf32>
      %67 = arith.negf %66 : vector<8x32xf32>
      %68 = math.exp %67 : vector<8x32xf32>
      %cst_28 = arith.constant 1.000000e+00 : f32
      %69 = vector.broadcast %cst_28 : f32 to vector<8x32xf32>
      %70 = arith.addf %69, %68 : vector<8x32xf32>
      %71 = arith.divf %69, %70 : vector<8x32xf32>
      %72 = vector.extract_strided_slice %65 {offsets = [0, 32], sizes = [8, 32], strides = [1, 1]} : vector<8x128xf32> to vector<8x32xf32>
      %73 = arith.negf %72 : vector<8x32xf32>
      %74 = math.exp %73 : vector<8x32xf32>
      %cst_29 = arith.constant 1.000000e+00 : f32
      %75 = vector.broadcast %cst_29 : f32 to vector<8x32xf32>
      %76 = arith.addf %75, %74 : vector<8x32xf32>
      %77 = arith.divf %75, %76 : vector<8x32xf32>
      %78 = vector.extract_strided_slice %65 {offsets = [0, 64], sizes = [8, 32], strides = [1, 1]} : vector<8x128xf32> to vector<8x32xf32>
      %79 = math.tanh %78 : vector<8x32xf32>
      %80 = vector.extract_strided_slice %65 {offsets = [0, 96], sizes = [8, 32], strides = [1, 1]} : vector<8x128xf32> to vector<8x32xf32>
      %81 = arith.negf %80 : vector<8x32xf32>
      %82 = math.exp %81 : vector<8x32xf32>
      %cst_30 = arith.constant 1.000000e+00 : f32
      %83 = vector.broadcast %cst_30 : f32 to vector<8x32xf32>
      %84 = arith.addf %83, %82 : vector<8x32xf32>
      %85 = arith.divf %83, %84 : vector<8x32xf32>
      %86 = arith.mulf %77, %25 : vector<8x32xf32>
      %87 = arith.mulf %71, %79 : vector<8x32xf32>
      %88 = arith.addf %86, %87 : vector<8x32xf32>
      %89 = math.tanh %88 : vector<8x32xf32>
      %90 = arith.mulf %85, %89 : vector<8x32xf32>
      %91 = arith.select %30, %90, %23 : vector<8x32xi1>, vector<8x32xf32>
      %92 = arith.select %30, %88, %25 : vector<8x32xi1>, vector<8x32xf32>
      %c1_i32_31 = arith.constant 1 : i32
      %93 = arith.addi %0, %c1_i32_31 : i32
      %94 = vector.broadcast %93 : i32 to vector<8x1xi32>
      %95 = arith.cmpi slt, %94, %12 : vector<8x1xi32>
      %96 = vector.shape_cast %95 : vector<8x1xi1> to vector<8x1xi1>
      %97 = vector.broadcast %96 : vector<8x1xi1> to vector<8x32xi1>
      %98 = arith.index_cast %c1_i32_31 : i32 to index
      %c0_32 = arith.constant 0 : index
      %c0_33 = arith.constant 0 : index
      %99 = vector.load %arg4[%98, %c0_32, %c0_33] : memref<4x8x128xf32, #tpu.memory_space<vmem>>, vector<1x8x128xf32>
      %100 = vector.shape_cast %99 : vector<1x8x128xf32> to vector<8x128xf32>
      %cst_34 = arith.constant dense<0.000000e+00> : vector<8x128xf32>
      %101 = tpu.matmul %61, %13, %cst_34 {dimension_numbers = #tpu.dot_dimension_numbers<[1], [0], [0], [1], [0, 0, 1, 1], [], []>} : vector<8x32xf32>, vector<32x128xf32>, vector<8x128xf32> -> vector<8x128xf32>
      %102 = arith.addf %100, %101 : vector<8x128xf32>
      %103 = vector.extract_strided_slice %102 {offsets = [0, 0], sizes = [8, 32], strides = [1, 1]} : vector<8x128xf32> to vector<8x32xf32>
      %104 = arith.negf %103 : vector<8x32xf32>
      %105 = math.exp %104 : vector<8x32xf32>
      %cst_35 = arith.constant 1.000000e+00 : f32
      %106 = vector.broadcast %cst_35 : f32 to vector<8x32xf32>
      %107 = arith.addf %106, %105 : vector<8x32xf32>
      %108 = arith.divf %106, %107 : vector<8x32xf32>
      %109 = vector.extract_strided_slice %102 {offsets = [0, 32], sizes = [8, 32], strides = [1, 1]} : vector<8x128xf32> to vector<8x32xf32>
      %110 = arith.negf %109 : vector<8x32xf32>
      %111 = math.exp %110 : vector<8x32xf32>
      %cst_36 = arith.constant 1.000000e+00 : f32
      %112 = vector.broadcast %cst_36 : f32 to vector<8x32xf32>
      %113 = arith.addf %112, %111 : vector<8x32xf32>
      %114 = arith.divf %112, %113 : vector<8x32xf32>
      %115 = vector.extract_strided_slice %102 {offsets = [0, 64], sizes = [8, 32], strides = [1, 1]} : vector<8x128xf32> to vector<8x32xf32>
      %116 = math.tanh %115 : vector<8x32xf32>
      %117 = vector.extract_strided_slice %102 {offsets = [0, 96], sizes = [8, 32], strides = [1, 1]} : vector<8x128xf32> to vector<8x32xf32>
      %118 = arith.negf %117 : vector<8x32xf32>
      %119 = math.exp %118 : vector<8x32xf32>
      %cst_37 = arith.constant 1.000000e+00 : f32
      %120 = vector.broadcast %cst_37 : f32 to vector<8x32xf32>
      %121 = arith.addf %120, %119 : vector<8x32xf32>
      %122 = arith.divf %120, %121 : vector<8x32xf32>
      %123 = arith.mulf %114, %62 : vector<8x32xf32>
      %124 = arith.mulf %108, %116 : vector<8x32xf32>
      %125 = arith.addf %123, %124 : vector<8x32xf32>
      %126 = math.tanh %125 : vector<8x32xf32>
      %127 = arith.mulf %122, %126 : vector<8x32xf32>
      %128 = arith.select %97, %127, %61 : vector<8x32xi1>, vector<8x32xf32>
      %129 = arith.select %97, %125, %62 : vector<8x32xi1>, vector<8x32xf32>
      %130 = tpu.concatenate %128, %91 in 1 : vector<8x32xf32>, vector<8x32xf32> -> vector<8x64xf32>
      %cst_38 = arith.constant dense<0.000000e+00> : vector<8x128xf32>
      %131 = tpu.matmul %130, %14, %cst_38 {dimension_numbers = #tpu.dot_dimension_numbers<[1], [0], [0], [1], [0, 0, 1, 1], [], []>} : vector<8x64xf32>, vector<64x128xf32>, vector<8x128xf32> -> vector<8x128xf32>
      %132 = arith.addf %131, %17 : vector<8x128xf32>
      %133 = vector.extract_strided_slice %132 {offsets = [0, 0], sizes = [8, 32], strides = [1, 1]} : vector<8x128xf32> to vector<8x32xf32>
      %134 = arith.negf %133 : vector<8x32xf32>
      %135 = math.exp %134 : vector<8x32xf32>
      %cst_39 = arith.constant 1.000000e+00 : f32
      %136 = vector.broadcast %cst_39 : f32 to vector<8x32xf32>
      %137 = arith.addf %136, %135 : vector<8x32xf32>
      %138 = arith.divf %136, %137 : vector<8x32xf32>
      %139 = vector.extract_strided_slice %132 {offsets = [0, 32], sizes = [8, 32], strides = [1, 1]} : vector<8x128xf32> to vector<8x32xf32>
      %140 = arith.negf %139 : vector<8x32xf32>
      %141 = math.exp %140 : vector<8x32xf32>
      %cst_40 = arith.constant 1.000000e+00 : f32
      %142 = vector.broadcast %cst_40 : f32 to vector<8x32xf32>
      %143 = arith.addf %142, %141 : vector<8x32xf32>
      %144 = arith.divf %142, %143 : vector<8x32xf32>
      %145 = vector.extract_strided_slice %132 {offsets = [0, 64], sizes = [8, 32], strides = [1, 1]} : vector<8x128xf32> to vector<8x32xf32>
      %146 = math.tanh %145 : vector<8x32xf32>
      %147 = vector.extract_strided_slice %132 {offsets = [0, 96], sizes = [8, 32], strides = [1, 1]} : vector<8x128xf32> to vector<8x32xf32>
      %148 = arith.negf %147 : vector<8x32xf32>
      %149 = math.exp %148 : vector<8x32xf32>
      %cst_41 = arith.constant 1.000000e+00 : f32
      %150 = vector.broadcast %cst_41 : f32 to vector<8x32xf32>
      %151 = arith.addf %150, %149 : vector<8x32xf32>
      %152 = arith.divf %150, %151 : vector<8x32xf32>
      %153 = arith.mulf %144, %92 : vector<8x32xf32>
      %154 = arith.mulf %138, %146 : vector<8x32xf32>
      %155 = arith.addf %153, %154 : vector<8x32xf32>
      %156 = math.tanh %155 : vector<8x32xf32>
      %157 = arith.mulf %152, %156 : vector<8x32xf32>
      %158 = arith.select %97, %157, %91 : vector<8x32xi1>, vector<8x32xf32>
      %159 = arith.select %97, %155, %92 : vector<8x32xi1>, vector<8x32xf32>
      %c2_i32 = arith.constant 2 : i32
      %160 = arith.addi %0, %c2_i32 : i32
      %161 = vector.broadcast %160 : i32 to vector<8x1xi32>
      %162 = arith.cmpi slt, %161, %12 : vector<8x1xi32>
      %163 = vector.shape_cast %162 : vector<8x1xi1> to vector<8x1xi1>
      %164 = vector.broadcast %163 : vector<8x1xi1> to vector<8x32xi1>
      %165 = arith.index_cast %c2_i32 : i32 to index
      %c0_42 = arith.constant 0 : index
      %c0_43 = arith.constant 0 : index
      %166 = vector.load %arg4[%165, %c0_42, %c0_43] : memref<4x8x128xf32, #tpu.memory_space<vmem>>, vector<1x8x128xf32>
      %167 = vector.shape_cast %166 : vector<1x8x128xf32> to vector<8x128xf32>
      %cst_44 = arith.constant dense<0.000000e+00> : vector<8x128xf32>
      %168 = tpu.matmul %128, %13, %cst_44 {dimension_numbers = #tpu.dot_dimension_numbers<[1], [0], [0], [1], [0, 0, 1, 1], [], []>} : vector<8x32xf32>, vector<32x128xf32>, vector<8x128xf32> -> vector<8x128xf32>
      %169 = arith.addf %167, %168 : vector<8x128xf32>
      %170 = vector.extract_strided_slice %169 {offsets = [0, 0], sizes = [8, 32], strides = [1, 1]} : vector<8x128xf32> to vector<8x32xf32>
      %171 = arith.negf %170 : vector<8x32xf32>
      %172 = math.exp %171 : vector<8x32xf32>
      %cst_45 = arith.constant 1.000000e+00 : f32
      %173 = vector.broadcast %cst_45 : f32 to vector<8x32xf32>
      %174 = arith.addf %173, %172 : vector<8x32xf32>
      %175 = arith.divf %173, %174 : vector<8x32xf32>
      %176 = vector.extract_strided_slice %169 {offsets = [0, 32], sizes = [8, 32], strides = [1, 1]} : vector<8x128xf32> to vector<8x32xf32>
      %177 = arith.negf %176 : vector<8x32xf32>
      %178 = math.exp %177 : vector<8x32xf32>
      %cst_46 = arith.constant 1.000000e+00 : f32
      %179 = vector.broadcast %cst_46 : f32 to vector<8x32xf32>
      %180 = arith.addf %179, %178 : vector<8x32xf32>
      %181 = arith.divf %179, %180 : vector<8x32xf32>
      %182 = vector.extract_strided_slice %169 {offsets = [0, 64], sizes = [8, 32], strides = [1, 1]} : vector<8x128xf32> to vector<8x32xf32>
      %183 = math.tanh %182 : vector<8x32xf32>
      %184 = vector.extract_strided_slice %169 {offsets = [0, 96], sizes = [8, 32], strides = [1, 1]} : vector<8x128xf32> to vector<8x32xf32>
      %185 = arith.negf %184 : vector<8x32xf32>
      %186 = math.exp %185 : vector<8x32xf32>
      %cst_47 = arith.constant 1.000000e+00 : f32
      %187 = vector.broadcast %cst_47 : f32 to vector<8x32xf32>
      %188 = arith.addf %187, %186 : vector<8x32xf32>
      %189 = arith.divf %187, %188 : vector<8x32xf32>
      %190 = arith.mulf %181, %129 : vector<8x32xf32>
      %191 = arith.mulf %175, %183 : vector<8x32xf32>
      %192 = arith.addf %190, %191 : vector<8x32xf32>
      %193 = math.tanh %192 : vector<8x32xf32>
      %194 = arith.mulf %189, %193 : vector<8x32xf32>
      %195 = arith.select %164, %194, %128 : vector<8x32xi1>, vector<8x32xf32>
      %196 = arith.select %164, %192, %129 : vector<8x32xi1>, vector<8x32xf32>
      %197 = tpu.concatenate %195, %158 in 1 : vector<8x32xf32>, vector<8x32xf32> -> vector<8x64xf32>
      %cst_48 = arith.constant dense<0.000000e+00> : vector<8x128xf32>
      %198 = tpu.matmul %197, %14, %cst_48 {dimension_numbers = #tpu.dot_dimension_numbers<[1], [0], [0], [1], [0, 0, 1, 1], [], []>} : vector<8x64xf32>, vector<64x128xf32>, vector<8x128xf32> -> vector<8x128xf32>
      %199 = arith.addf %198, %17 : vector<8x128xf32>
      %200 = vector.extract_strided_slice %199 {offsets = [0, 0], sizes = [8, 32], strides = [1, 1]} : vector<8x128xf32> to vector<8x32xf32>
      %201 = arith.negf %200 : vector<8x32xf32>
      %202 = math.exp %201 : vector<8x32xf32>
      %cst_49 = arith.constant 1.000000e+00 : f32
      %203 = vector.broadcast %cst_49 : f32 to vector<8x32xf32>
      %204 = arith.addf %203, %202 : vector<8x32xf32>
      %205 = arith.divf %203, %204 : vector<8x32xf32>
      %206 = vector.extract_strided_slice %199 {offsets = [0, 32], sizes = [8, 32], strides = [1, 1]} : vector<8x128xf32> to vector<8x32xf32>
      %207 = arith.negf %206 : vector<8x32xf32>
      %208 = math.exp %207 : vector<8x32xf32>
      %cst_50 = arith.constant 1.000000e+00 : f32
      %209 = vector.broadcast %cst_50 : f32 to vector<8x32xf32>
      %210 = arith.addf %209, %208 : vector<8x32xf32>
      %211 = arith.divf %209, %210 : vector<8x32xf32>
      %212 = vector.extract_strided_slice %199 {offsets = [0, 64], sizes = [8, 32], strides = [1, 1]} : vector<8x128xf32> to vector<8x32xf32>
      %213 = math.tanh %212 : vector<8x32xf32>
      %214 = vector.extract_strided_slice %199 {offsets = [0, 96], sizes = [8, 32], strides = [1, 1]} : vector<8x128xf32> to vector<8x32xf32>
      %215 = arith.negf %214 : vector<8x32xf32>
      %216 = math.exp %215 : vector<8x32xf32>
      %cst_51 = arith.constant 1.000000e+00 : f32
      %217 = vector.broadcast %cst_51 : f32 to vector<8x32xf32>
      %218 = arith.addf %217, %216 : vector<8x32xf32>
      %219 = arith.divf %217, %218 : vector<8x32xf32>
      %220 = arith.mulf %211, %159 : vector<8x32xf32>
      %221 = arith.mulf %205, %213 : vector<8x32xf32>
      %222 = arith.addf %220, %221 : vector<8x32xf32>
      %223 = math.tanh %222 : vector<8x32xf32>
      %224 = arith.mulf %219, %223 : vector<8x32xf32>
      %225 = arith.select %164, %224, %158 : vector<8x32xi1>, vector<8x32xf32>
      %226 = arith.select %164, %222, %159 : vector<8x32xi1>, vector<8x32xf32>
      %c3_i32 = arith.constant 3 : i32
      %227 = arith.addi %0, %c3_i32 : i32
      %228 = vector.broadcast %227 : i32 to vector<8x1xi32>
      %229 = arith.cmpi slt, %228, %12 : vector<8x1xi32>
      %230 = vector.shape_cast %229 : vector<8x1xi1> to vector<8x1xi1>
      %231 = vector.broadcast %230 : vector<8x1xi1> to vector<8x32xi1>
      %232 = arith.index_cast %c3_i32 : i32 to index
      %c0_52 = arith.constant 0 : index
      %c0_53 = arith.constant 0 : index
      %233 = vector.load %arg4[%232, %c0_52, %c0_53] : memref<4x8x128xf32, #tpu.memory_space<vmem>>, vector<1x8x128xf32>
      %234 = vector.shape_cast %233 : vector<1x8x128xf32> to vector<8x128xf32>
      %cst_54 = arith.constant dense<0.000000e+00> : vector<8x128xf32>
      %235 = tpu.matmul %195, %13, %cst_54 {dimension_numbers = #tpu.dot_dimension_numbers<[1], [0], [0], [1], [0, 0, 1, 1], [], []>} : vector<8x32xf32>, vector<32x128xf32>, vector<8x128xf32> -> vector<8x128xf32>
      %236 = arith.addf %234, %235 : vector<8x128xf32>
      %237 = vector.extract_strided_slice %236 {offsets = [0, 0], sizes = [8, 32], strides = [1, 1]} : vector<8x128xf32> to vector<8x32xf32>
      %238 = arith.negf %237 : vector<8x32xf32>
      %239 = math.exp %238 : vector<8x32xf32>
      %cst_55 = arith.constant 1.000000e+00 : f32
      %240 = vector.broadcast %cst_55 : f32 to vector<8x32xf32>
      %241 = arith.addf %240, %239 : vector<8x32xf32>
      %242 = arith.divf %240, %241 : vector<8x32xf32>
      %243 = vector.extract_strided_slice %236 {offsets = [0, 32], sizes = [8, 32], strides = [1, 1]} : vector<8x128xf32> to vector<8x32xf32>
      %244 = arith.negf %243 : vector<8x32xf32>
      %245 = math.exp %244 : vector<8x32xf32>
      %cst_56 = arith.constant 1.000000e+00 : f32
      %246 = vector.broadcast %cst_56 : f32 to vector<8x32xf32>
      %247 = arith.addf %246, %245 : vector<8x32xf32>
      %248 = arith.divf %246, %247 : vector<8x32xf32>
      %249 = vector.extract_strided_slice %236 {offsets = [0, 64], sizes = [8, 32], strides = [1, 1]} : vector<8x128xf32> to vector<8x32xf32>
      %250 = math.tanh %249 : vector<8x32xf32>
      %251 = vector.extract_strided_slice %236 {offsets = [0, 96], sizes = [8, 32], strides = [1, 1]} : vector<8x128xf32> to vector<8x32xf32>
      %252 = arith.negf %251 : vector<8x32xf32>
      %253 = math.exp %252 : vector<8x32xf32>
      %cst_57 = arith.constant 1.000000e+00 : f32
      %254 = vector.broadcast %cst_57 : f32 to vector<8x32xf32>
      %255 = arith.addf %254, %253 : vector<8x32xf32>
      %256 = arith.divf %254, %255 : vector<8x32xf32>
      %257 = arith.mulf %248, %196 : vector<8x32xf32>
      %258 = arith.mulf %242, %250 : vector<8x32xf32>
      %259 = arith.addf %257, %258 : vector<8x32xf32>
      %260 = math.tanh %259 : vector<8x32xf32>
      %261 = arith.mulf %256, %260 : vector<8x32xf32>
      %262 = arith.select %231, %261, %195 : vector<8x32xi1>, vector<8x32xf32>
      %263 = arith.select %231, %259, %196 : vector<8x32xi1>, vector<8x32xf32>
      %264 = tpu.concatenate %262, %225 in 1 : vector<8x32xf32>, vector<8x32xf32> -> vector<8x64xf32>
      %cst_58 = arith.constant dense<0.000000e+00> : vector<8x128xf32>
      %265 = tpu.matmul %264, %14, %cst_58 {dimension_numbers = #tpu.dot_dimension_numbers<[1], [0], [0], [1], [0, 0, 1, 1], [], []>} : vector<8x64xf32>, vector<64x128xf32>, vector<8x128xf32> -> vector<8x128xf32>
      %266 = arith.addf %265, %17 : vector<8x128xf32>
      %267 = vector.extract_strided_slice %266 {offsets = [0, 0], sizes = [8, 32], strides = [1, 1]} : vector<8x128xf32> to vector<8x32xf32>
      %268 = arith.negf %267 : vector<8x32xf32>
      %269 = math.exp %268 : vector<8x32xf32>
      %cst_59 = arith.constant 1.000000e+00 : f32
      %270 = vector.broadcast %cst_59 : f32 to vector<8x32xf32>
      %271 = arith.addf %270, %269 : vector<8x32xf32>
      %272 = arith.divf %270, %271 : vector<8x32xf32>
      %273 = vector.extract_strided_slice %266 {offsets = [0, 32], sizes = [8, 32], strides = [1, 1]} : vector<8x128xf32> to vector<8x32xf32>
      %274 = arith.negf %273 : vector<8x32xf32>
      %275 = math.exp %274 : vector<8x32xf32>
      %cst_60 = arith.constant 1.000000e+00 : f32
      %276 = vector.broadcast %cst_60 : f32 to vector<8x32xf32>
      %277 = arith.addf %276, %275 : vector<8x32xf32>
      %278 = arith.divf %276, %277 : vector<8x32xf32>
      %279 = vector.extract_strided_slice %266 {offsets = [0, 64], sizes = [8, 32], strides = [1, 1]} : vector<8x128xf32> to vector<8x32xf32>
      %280 = math.tanh %279 : vector<8x32xf32>
      %281 = vector.extract_strided_slice %266 {offsets = [0, 96], sizes = [8, 32], strides = [1, 1]} : vector<8x128xf32> to vector<8x32xf32>
      %282 = arith.negf %281 : vector<8x32xf32>
      %283 = math.exp %282 : vector<8x32xf32>
      %cst_61 = arith.constant 1.000000e+00 : f32
      %284 = vector.broadcast %cst_61 : f32 to vector<8x32xf32>
      %285 = arith.addf %284, %283 : vector<8x32xf32>
      %286 = arith.divf %284, %285 : vector<8x32xf32>
      %287 = arith.mulf %278, %226 : vector<8x32xf32>
      %288 = arith.mulf %272, %280 : vector<8x32xf32>
      %289 = arith.addf %287, %288 : vector<8x32xf32>
      %290 = math.tanh %289 : vector<8x32xf32>
      %291 = arith.mulf %286, %290 : vector<8x32xf32>
      %292 = arith.select %231, %291, %225 : vector<8x32xi1>, vector<8x32xf32>
      %293 = arith.select %231, %289, %226 : vector<8x32xi1>, vector<8x32xf32>
      %c4_i32_62 = arith.constant 4 : i32
      %c0_63 = arith.constant 0 : index
      %c0_64 = arith.constant 0 : index
      %c0_65 = arith.constant 0 : index
      %294 = vector.load %arg9[%c0_63, %c0_64, %c0_65] : memref<2x8x32xf32, #tpu.memory_space<vmem>>, vector<1x8x32xf32>
      %295 = vector.shape_cast %294 : vector<1x8x32xf32> to vector<8x32xf32>
      %296 = vector.shape_cast %262 : vector<8x32xf32> to vector<1x8x32xf32>
      tpu.vector_store %arg9[%c0_63, %c0_64, %c0_65], %296 {strides = array<i32>} : memref<2x8x32xf32, #tpu.memory_space<vmem>>, vector<1x8x32xf32>,
      %c0_66 = arith.constant 0 : index
      %c0_67 = arith.constant 0 : index
      %c0_68 = arith.constant 0 : index
      %297 = vector.load %arg10[%c0_66, %c0_67, %c0_68] : memref<2x8x32xf32, #tpu.memory_space<vmem>>, vector<1x8x32xf32>
      %298 = vector.shape_cast %297 : vector<1x8x32xf32> to vector<8x32xf32>
      %299 = vector.shape_cast %263 : vector<8x32xf32> to vector<1x8x32xf32>
      tpu.vector_store %arg10[%c0_66, %c0_67, %c0_68], %299 {strides = array<i32>} : memref<2x8x32xf32, #tpu.memory_space<vmem>>, vector<1x8x32xf32>,
      %c1_69 = arith.constant 1 : index
      %c0_70 = arith.constant 0 : index
      %c0_71 = arith.constant 0 : index
      %300 = vector.load %arg9[%c1_69, %c0_70, %c0_71] : memref<2x8x32xf32, #tpu.memory_space<vmem>>, vector<1x8x32xf32>
      %301 = vector.shape_cast %300 : vector<1x8x32xf32> to vector<8x32xf32>
      %302 = vector.shape_cast %292 : vector<8x32xf32> to vector<1x8x32xf32>
      tpu.vector_store %arg9[%c1_69, %c0_70, %c0_71], %302 {strides = array<i32>} : memref<2x8x32xf32, #tpu.memory_space<vmem>>, vector<1x8x32xf32>,
      %c1_72 = arith.constant 1 : index
      %c0_73 = arith.constant 0 : index
      %c0_74 = arith.constant 0 : index
      %303 = vector.load %arg10[%c1_72, %c0_73, %c0_74] : memref<2x8x32xf32, #tpu.memory_space<vmem>>, vector<1x8x32xf32>
      %304 = vector.shape_cast %303 : vector<1x8x32xf32> to vector<8x32xf32>
      %305 = vector.shape_cast %293 : vector<8x32xf32> to vector<1x8x32xf32>
      tpu.vector_store %arg10[%c1_72, %c0_73, %c0_74], %305 {strides = array<i32>} : memref<2x8x32xf32, #tpu.memory_space<vmem>>, vector<1x8x32xf32>,
    } else {
    }
    %c1_i32 = arith.constant 1 : i32
    %9 = arith.cmpi eq, %arg1, %c1_i32 : i32
    %10 = arith.extui %9 : i1 to i32
    %c0_i32_2 = arith.constant 0 : i32
    %11 = arith.cmpi ne, %10, %c0_i32_2 : i32
    scf.if %11 {
      %c0 = arith.constant 0 : index
      %c0_3 = arith.constant 0 : index
      %c0_4 = arith.constant 0 : index
      %12 = vector.load %arg9[%c0, %c0_3, %c0_4] : memref<2x8x32xf32, #tpu.memory_space<vmem>>, vector<2x8x32xf32>
      %c0_5 = arith.constant 0 : index
      %c0_6 = arith.constant 0 : index
      %c0_7 = arith.constant 0 : index
      %13 = vector.load %arg8[%c0_5, %c0_6, %c0_7] : memref<2x8x32xf32, #tpu.memory_space<vmem>>, vector<2x8x32xf32>
      tpu.vector_store %arg8[%c0_5, %c0_6, %c0_7], %12 {strides = array<i32>} : memref<2x8x32xf32, #tpu.memory_space<vmem>>, vector<2x8x32xf32>,
    } else {
    }
    return
  }
  func.func @transform_0(%arg0: i32, %arg1: i32, %arg2: memref<1xi32, #tpu.memory_space<smem>>) -> (i32, i32) {
    %c0_i32 = arith.constant 0 : i32
    %c0_i32_0 = arith.constant 0 : i32
    return %arg0, %c0_i32 : i32, i32
  }
  func.func @transform_1(%arg0: i32, %arg1: i32, %arg2: memref<1xi32, #tpu.memory_space<smem>>) -> (i32, i32, i32) {
    %c0_i32 = arith.constant 0 : i32
    %c0_i32_0 = arith.constant 0 : i32
    return %arg1, %arg0, %c0_i32 : i32, i32, i32
  }
  func.func @transform_2(%arg0: i32, %arg1: i32, %arg2: memref<1xi32, #tpu.memory_space<smem>>) -> (i32, i32) {
    %c0_i32 = arith.constant 0 : i32
    %c0_i32_0 = arith.constant 0 : i32
    %c0_i32_1 = arith.constant 0 : i32
    return %c0_i32, %c0_i32_0 : i32, i32
  }
  func.func @transform_3(%arg0: i32, %arg1: i32, %arg2: memref<1xi32, #tpu.memory_space<smem>>) -> (i32, i32) {
    %c0_i32 = arith.constant 0 : i32
    %c0_i32_0 = arith.constant 0 : i32
    %c0_i32_1 = arith.constant 0 : i32
    return %c0_i32, %c0_i32_0 : i32, i32
  }
  func.func @transform_4(%arg0: i32, %arg1: i32, %arg2: memref<1xi32, #tpu.memory_space<smem>>) -> (i32, i32) {
    %c0_i32 = arith.constant 0 : i32
    %c0_i32_0 = arith.constant 0 : i32
    %c0_i32_1 = arith.constant 0 : i32
    return %c0_i32, %c0_i32_0 : i32, i32
  }
  func.func @transform_5(%arg0: i32, %arg1: i32, %arg2: memref<1xi32, #tpu.memory_space<smem>>) -> (i32, i32, i32) {
    %c0_i32 = arith.constant 0 : i32
    %c0_i32_0 = arith.constant 0 : i32
    %c0_i32_1 = arith.constant 0 : i32
    return %c0_i32, %arg0, %c0_i32_0 : i32, i32, i32
  }
}

</mosaic_0001>

<llo_original>
// kernel: tpu_custom_call.1
$region0: #{tpu_custom_call.1}
  #allocation0 [shape = 'u32[]', space=smem, size = 0x4, offset = 0x4, fixed_abs, tag = 'smem constant byte address 0x4 - core index']
  #allocation1 [shape = 'u32[72,128]{1,0:T(1,128)}', space=vmem, size = 0x9000, scoped, tag = 'internal scratch']
  #allocation2 [shape = 'f32[2,8,32]{2,1,0:T(8,128)}', space=vmem, size = 0x2000, scoped, tag = 'scratch operand']
  #allocation3 [shape = 'f32[2,8,32]{2,1,0:T(8,128)}', space=vmem, size = 0x2000, scoped, tag = 'scratch operand']
  #allocation4 [shape = 's32[1]{0}', space=sflag, size = 0x4, scoped, tag = 'scoped memory for tpu_custom_call.1']
  #allocation5 [shape = 's32[1]{0:T(128)S(6)}', space=smem, size = 0x200, scoped, tag = 'prefetched SMEM operand 0']
  %s0 = inlined_call_operand.<no memory space> [shape: s32[1], index: 0, kind: input, shape index: {}]
  %s1 = inlined_call_operand.vmem [shape: s32[8,1], index: 1, kind: input, shape index: {}]
  %s2 = inlined_call_operand.hbm [shape: f32[8,8,128], index: 2, kind: input, shape index: {}]
  %s3 = inlined_call_operand.hbm [shape: f32[32,128], index: 3, kind: input, shape index: {}]
  %s4 = inlined_call_operand.hbm [shape: f32[64,128], index: 4, kind: input, shape index: {}]
  %s5 = inlined_call_operand.vmem [shape: f32[1,128], index: 5, kind: input, shape index: {}]
  %s6 = inlined_call_operand.hbm [shape: f32[2,8,32], index: 6, kind: output, shape index: {}]
  %s7 = sld [smem:[#allocation0]]
  $region77: #{tpu_custom_call.1} parent=0
    _
  %s9 = ssub.s32 1, %s7
  %s10 = scalar_select 0, %s9, %s7
  %11 = sst [smem:[#allocation5]] %s0
  $region1: #{tpu_custom_call.1} parent=0
    #allocation6 [shape = 'u8[32768]{0}', space=vmem, size = 0x8000, scoped, tag = 'input window, operand 2']
    #allocation7 [shape = 's32[2]{0}', space=sflag, size = 0x8, scoped, tag = 'scoped memory for tpu_custom_call.1']
    #allocation8 [shape = 's32[2]{0}', space=sflag, size = 0x8, scoped, tag = 'scoped memory for tpu_custom_call.1']
    #allocation9 [shape = 'u8[16384]{0}', space=vmem, size = 0x4000, scoped, tag = 'input window, operand 3, single buffered']
    #allocation10 [shape = 's32[1]{0}', space=sflag, size = 0x4, scoped, tag = 'scoped memory for tpu_custom_call.1']
    #allocation11 [shape = 'u8[32768]{0}', space=vmem, size = 0x8000, scoped, tag = 'input window, operand 4, single buffered']
    #allocation12 [shape = 'u8[8192]{0}', space=vmem, size = 0x2000, scoped, tag = 'output window, operand 0, single buffered']
    %12 = vsyncpa [#allocation7], 0
    %s13 = scalar_lea.sflag [#allocation7], 1
    %14 = vsyncpa %s13, 0
    %15 = vsyncpa [#allocation10], 0
    %16 = vsyncpa [#allocation8], 0
    loop: start=0, step=1, limit=4
    $region2: #{tpu_custom_call.1} parent=1 // loop_pre_header
      _
    $region3: #{tpu_custom_call.1} parent=1 // loop_header
      %s18 = sphi 0, %s22
      %p19 = scmp.ge.s32.totalorder %s18, 4
      %s25 = sphi 0, %s37
      %s26 = sphi 0, %s33
      %s27 = sphi 0, %s25
      %s28 = sphi 0, %s26
      %s29 = sphi 0, %s27
      %s30 = sphi 0, %s28
      %s40 = sphi 0, %s42
      %s43 = sphi 0, %s40
      %s44 = sphi 0, %s43
      %s60 = sphi 0, %s44
      %s68 = sphi 0, %s70
      %s71 = sphi 0, %s68
      %s72 = sphi 0, %s71
      %s88 = sphi 0, %s72
      %s92 = sphi 0, %s92
      %s94 = sphi 0, %s92
      %s95 = sphi 0, %s94
      %s109 = sphi 0, %s95
      %s113 = sphi 0, %s113
      %s115 = sphi 0, %s113
      %s116 = sphi 0, %s115
      %s130 = sphi 0, %s116
      %s134 = sphi 0, %s134
      %s136 = sphi 0, %s134
      %s137 = sphi 0, %s136
      %s151 = sphi 0, %s137
      %s157 = sphi 0, %s159
      %s160 = sphi 0, %s157
      %s161 = sphi 0, %s160
      %s177 = sphi 0, %s161
    $region4: #{tpu_custom_call.1} parent=1 // loop_header_branch
      %21 = sbr.rel (%p19) target = $region8
    $region5: #{tpu_custom_call.1} parent=1 // loop_body
      %s23 = ssub.s32 %s18, 1
      %s24 = ssub.s32 %s18, 2
      %s31 = sadd.s32 1, %s26
      %p32 = scmp.ge.s32.totalorder %s31, 2
      %s33 = scalar_select %p32, 0, %s31
      %s34 = sadd.s32 1, %s25
      %s35 = scalar_select %p32, %s34, %s25
      %p36 = scmp.ge.s32.totalorder %s35, 1
      %s37 = scalar_select %p36, 0, %s35
      %s38 = ssub.s32 %s25, %s37
      %p39 = scmp.eq.s32.totalorder %s38, 0
      %s41 = sadd.s32 %s40, 1
      %s42 = scalar_select %p39, %s40, %s41
      %p45 = pneg %p39
      %p46 = scmp.eq.s32.totalorder %s18, 1
      %p47 = por %p45, %p46
      %p48 = scmp.ne.s32.totalorder %s40, %s43
      %p49 = scmp.eq.s32.totalorder %s18, 0
      %p50 = por %p48, %p49
      %p51 = scmp.ne.s32.totalorder %s40, %s43
      %p52 = scmp.eq.s32.totalorder %s23, 1
      %p53 = por %p51, %p52
      %p54 = scmp.ne.s32.totalorder %s43, %s44
      %p55 = scmp.eq.s32.totalorder %s23, 0
      %p56 = por %p54, %p55
      %p57 = scmp.ne.s32.totalorder %s43, %s44
      %p58 = scmp.eq.s32.totalorder %s24, 1
      %p59 = por %p57, %p58
      %p61 = scmp.ne.s32.totalorder %s44, %s60
      %p62 = scmp.eq.s32.totalorder %s24, 0
      %p63 = por %p61, %p62
      %s64 = ssub.s32 %s26, %s33
      %s65 = ssub.s32 %s25, %s37
      %s66 = sor.u32 %s64, %s65
      %p67 = scmp.eq.s32.totalorder %s66, 0
      %s69 = sadd.s32 %s68, 1
      %s70 = scalar_select %p67, %s68, %s69
      %p73 = pneg %p67
      %p74 = scmp.eq.s32.totalorder %s18, 1
      %p75 = por %p73, %p74
      %p76 = scmp.ne.s32.totalorder %s68, %s71
      %p77 = scmp.eq.s32.totalorder %s18, 0
      %p78 = por %p76, %p77
      %p79 = scmp.ne.s32.totalorder %s68, %s71
      %p80 = scmp.eq.s32.totalorder %s23, 1
      %p81 = por %p79, %p80
      %p82 = scmp.ne.s32.totalorder %s71, %s72
      %p83 = scmp.eq.s32.totalorder %s23, 0
      %p84 = por %p82, %p83
      %p85 = scmp.ne.s32.totalorder %s71, %s72
      %p86 = scmp.eq.s32.totalorder %s24, 1
      %p87 = por %p85, %p86
      %p89 = scmp.ne.s32.totalorder %s72, %s88
      %p90 = scmp.eq.s32.totalorder %s24, 0
      %p91 = por %p89, %p90
      %s93 = sadd.s32 %s92, 1
      %p96 = scmp.eq.s32.totalorder %s18, 1
      %p97 = scmp.ne.s32.totalorder %s92, %s94
      %p98 = scmp.eq.s32.totalorder %s18, 0
      %p99 = por %p97, %p98
      %p100 = scmp.ne.s32.totalorder %s92, %s94
      %p101 = scmp.eq.s32.totalorder %s23, 1
      %p102 = por %p100, %p101
      %p103 = scmp.ne.s32.totalorder %s94, %s95
      %p104 = scmp.eq.s32.totalorder %s23, 0
      %p105 = por %p103, %p104
      %p106 = scmp.ne.s32.totalorder %s94, %s95
      %p107 = scmp.eq.s32.totalorder %s24, 1
      %p108 = por %p106, %p107
      %p110 = scmp.ne.s32.totalorder %s95, %s109
      %p111 = scmp.eq.s32.totalorder %s24, 0
      %p112 = por %p110, %p111
      %s114 = sadd.s32 %s113, 1
      %p117 = scmp.eq.s32.totalorder %s18, 1
      %p118 = scmp.ne.s32.totalorder %s113, %s115
      %p119 = scmp.eq.s32.totalorder %s18, 0
      %p120 = por %p118, %p119
      %p121 = scmp.ne.s32.totalorder %s113, %s115
      %p122 = scmp.eq.s32.totalorder %s23, 1
      %p123 = por %p121, %p122
      %p124 = scmp.ne.s32.totalorder %s115, %s116
      %p125 = scmp.eq.s32.totalorder %s23, 0
      %p126 = por %p124, %p125
      %p127 = scmp.ne.s32.totalorder %s115, %s116
      %p128 = scmp.eq.s32.totalorder %s24, 1
      %p129 = por %p127, %p128
      %p131 = scmp.ne.s32.totalorder %s116, %s130
      %p132 = scmp.eq.s32.totalorder %s24, 0
      %p133 = por %p131, %p132
      %s135 = sadd.s32 %s134, 1
      %p138 = scmp.eq.s32.totalorder %s18, 1
      %p139 = scmp.ne.s32.totalorder %s134, %s136
      %p140 = scmp.eq.s32.totalorder %s18, 0
      %p141 = por %p139, %p140
      %p142 = scmp.ne.s32.totalorder %s134, %s136
      %p143 = scmp.eq.s32.totalorder %s23, 1
      %p144 = por %p142, %p143
      %p145 = scmp.ne.s32.totalorder %s136, %s137
      %p146 = scmp.eq.s32.totalorder %s23, 0
      %p147 = por %p145, %p146
      %p148 = scmp.ne.s32.totalorder %s136, %s137
      %p149 = scmp.eq.s32.totalorder %s24, 1
      %p150 = por %p148, %p149
      %p152 = scmp.ne.s32.totalorder %s137, %s151
      %p153 = scmp.eq.s32.totalorder %s24, 0
      %p154 = por %p152, %p153
      %s155 = ssub.s32 %s25, %s37
      %p156 = scmp.eq.s32.totalorder %s155, 0
      %s158 = sadd.s32 %s157, 1
      %s159 = scalar_select %p156, %s157, %s158
      %p162 = pneg %p156
      %p163 = scmp.eq.s32.totalorder %s18, 1
      %p164 = por %p162, %p163
      %p165 = scmp.ne.s32.totalorder %s157, %s160
      %p166 = scmp.eq.s32.totalorder %s18, 0
      %p167 = por %p165, %p166
      %p168 = scmp.ne.s32.totalorder %s157, %s160
      %p169 = scmp.eq.s32.totalorder %s23, 1
      %p170 = por %p168, %p169
      %p171 = scmp.ne.s32.totalorder %s160, %s161
      %p172 = scmp.eq.s32.totalorder %s23, 0
      %p173 = por %p171, %p172
      %p174 = scmp.ne.s32.totalorder %s160, %s161
      %p175 = scmp.eq.s32.totalorder %s24, 1
      %p176 = por %p174, %p175
      %p178 = scmp.ne.s32.totalorder %s161, %s177
      %p179 = scmp.eq.s32.totalorder %s24, 0
      %p180 = por %p178, %p179
      %p181 = scmp.le.s32.totalorder 1, %s18
      %p182 = scmp.lt.s32.totalorder %s18, 3
      %p183 = pnand %p181, %p182
      %p184 = pneg %p183
      // Predicated region
      $region9: #{tpu_custom_call.1} parent=5 // pred_check
        _
      $region10: #{tpu_custom_call.1} parent=5 // pred_check_branch
        %186 = sbr.rel (%p183) target = $region12
      $region11: #{tpu_custom_call.1} parent=5 // pred_region
        %s187 = ssub.s32 %s18, 1
        // Predicated region
        $region13: #{tpu_custom_call.1} parent=11 // pred_check
          %p188 = pneg %p56
        $region14: #{tpu_custom_call.1} parent=11 // pred_check_branch
          %190 = sbr.rel (%p188) target = $region16
        $region15: #{tpu_custom_call.1} parent=11 // pred_region
          %p191 = scmp.lt.s32.totalorder %s27, 0
          %s192 = scalar_select %p191, %s27, 0
          %s193 = smul.addr %s192, 8
          %s194 = scalar_lea.vmem %s1, %s193
        $region16: #{tpu_custom_call.1} parent=11 // pred_fallthru
          _
        // Predicated region
        $region17: #{tpu_custom_call.1} parent=11 // pred_check
          %p195 = pneg %p105
        $region18: #{tpu_custom_call.1} parent=11 // pred_check_branch
          %197 = sbr.rel (%p195) target = $region20
        $region19: #{tpu_custom_call.1} parent=11 // pred_region
          %199 = vsyncadd [#allocation10], 0
          %s200 = sshll.u32 %s3, 4
          %s201 = int_to_ptr.hbm [resolvable:$true] %s200
          %s202 = sshll.u32 [#allocation9], 4
          %s203 = int_to_ptr.vmem [resolvable:$true] %s202
          %208 = dma.hbm_to_vmem [thread:$0]  %s201, 512, %s203, [#allocation10], 128, 128, 8
        $region20: #{tpu_custom_call.1} parent=11 // pred_fallthru
          _
        // Predicated region
        $region21: #{tpu_custom_call.1} parent=11 // pred_check
          %p209 = pneg %p126
        $region22: #{tpu_custom_call.1} parent=11 // pred_check_branch
          %211 = sbr.rel (%p209) target = $region24
        $region23: #{tpu_custom_call.1} parent=11 // pred_region
          %213 = vsyncadd [#allocation10], 0
          %s214 = sshll.u32 %s4, 4
          %s215 = int_to_ptr.hbm [resolvable:$true] %s214
          %s216 = sshll.u32 [#allocation11], 4
          %s217 = int_to_ptr.vmem [resolvable:$true] %s216
          %222 = dma.hbm_to_vmem [thread:$0]  %s215, 1024, %s217, [#allocation10], 128, 128, 8
        $region24: #{tpu_custom_call.1} parent=11 // pred_fallthru
          _
        // Predicated region
        $region25: #{tpu_custom_call.1} parent=11 // pred_check
          %p223 = pneg %p147
        $region26: #{tpu_custom_call.1} parent=11 // pred_check_branch
          %225 = sbr.rel (%p223) target = $region28
        $region27: #{tpu_custom_call.1} parent=11 // pred_region
          _
        $region28: #{tpu_custom_call.1} parent=11 // pred_fallthru
          _
      $region12: #{tpu_custom_call.1} parent=5 // pred_fallthru
        _
      %p226 = scmp.lt.s32.totalorder %s18, 2
      // Predicated region
      $region29: #{tpu_custom_call.1} parent=5 // pred_check
        %p227 = pneg %p226
      $region30: #{tpu_custom_call.1} parent=5 // pred_check_branch
        %229 = sbr.rel (%p227) target = $region32
      $region31: #{tpu_custom_call.1} parent=5 // pred_region
        // Predicated region
        $region33: #{tpu_custom_call.1} parent=31 // pred_check
          %p230 = pneg %p78
        $region34: #{tpu_custom_call.1} parent=31 // pred_check_branch
          %232 = sbr.rel (%p230) target = $region36
        $region35: #{tpu_custom_call.1} parent=31 // pred_region
          %s233 = sand.u32 %s68, 1
          %s234 = scalar_lea.sflag [#allocation7], %s233
          %s235 = sand.u32 %s68, 1
          %s236 = smul.addr %s235, 32
          %s237 = scalar_lea.vmem [#allocation6], %s236
          %s238 = smul.u32 4, %s26
          %240 = vsyncadd %s234, 0
          %s241 = sadd.s32 %s25, %s238
          %s242 = smul.addr %s241, 8
          %s243 = scalar_lea.hbm %s2, %s242
          %s244 = sshll.u32 %s243, 4
          %s245 = int_to_ptr.hbm [resolvable:$true] %s244
          %s246 = sshll.u32 %s237, 4
          %s247 = int_to_ptr.vmem [resolvable:$true] %s246
          %252 = dma.hbm_to_vmem [thread:$0]  %s245, 512, %s247, %s234, 128, 128, 8
        $region36: #{tpu_custom_call.1} parent=31 // pred_fallthru
          _
      $region32: #{tpu_custom_call.1} parent=5 // pred_fallthru
        _
      %p253 = scmp.le.s32.totalorder 1, %s18
      %p254 = scmp.lt.s32.totalorder %s18, 3
      %p255 = pnand %p253, %p254
      %p256 = pneg %p255
      // Predicated region
      $region37: #{tpu_custom_call.1} parent=5 // pred_check
        _
      $region38: #{tpu_custom_call.1} parent=5 // pred_check_branch
        %258 = sbr.rel (%p255) target = $region40
      $region39: #{tpu_custom_call.1} parent=5 // pred_region
        %s259 = ssub.s32 %s18, 1
        %s260 = sand.u32 %s71, 1
        %s261 = scalar_lea.sflag [#allocation7], %s260
        %s262 = sand.u32 %s71, 1
        %s263 = smul.addr %s262, 32
        %s264 = scalar_lea.vmem [#allocation6], %s263
        // Predicated region
        $region41: #{tpu_custom_call.1} parent=39 // pred_check
          %p265 = pneg %p84
        $region42: #{tpu_custom_call.1} parent=39 // pred_check_branch
          %267 = sbr.rel (%p265) target = $region44
        $region43: #{tpu_custom_call.1} parent=39 // pred_region
          %269 = dma.done %s261, 512
        $region44: #{tpu_custom_call.1} parent=39 // pred_fallthru
          _
        // Predicated region
        $region45: #{tpu_custom_call.1} parent=39 // pred_check
          %p270 = pneg %p105
        $region46: #{tpu_custom_call.1} parent=39 // pred_check_branch
          %272 = sbr.rel (%p270) target = $region48
        $region47: #{tpu_custom_call.1} parent=39 // pred_region
          %274 = dma.done [#allocation10], 512
        $region48: #{tpu_custom_call.1} parent=39 // pred_fallthru
          _
        // Predicated region
        $region49: #{tpu_custom_call.1} parent=39 // pred_check
          %p275 = pneg %p126
        $region50: #{tpu_custom_call.1} parent=39 // pred_check_branch
          %277 = sbr.rel (%p275) target = $region52
        $region51: #{tpu_custom_call.1} parent=39 // pred_region
          %279 = dma.done [#allocation10], 1024
        $region52: #{tpu_custom_call.1} parent=39 // pred_fallthru
          _
        %p280 = scmp.lt.s32.totalorder %s27, 0
        %s281 = scalar_select %p280, %s27, 0
        %s282 = smul.addr %s281, 8
        %s283 = scalar_lea.vmem %s1, %s282
        %p284 = pneg %p56
        %p285 = pneg %p53
        %s286 = sand.u32 %s71, 1
        %s287 = scalar_lea.sflag [#allocation7], %s286
        %s288 = sand.u32 %s71, 1
        %s289 = smul.addr %s288, 32
        %s290 = scalar_lea.vmem [#allocation6], %s289
        %p291 = pneg %p84
        %p292 = pneg %p81
        %p293 = pneg %p105
        %p294 = pneg %p102
        %p295 = pneg %p126
        %p296 = pneg %p123
        %p297 = pneg %p147
        %p298 = pneg %p144
        %p299 = pneg %p173
        %p300 = pneg %p170
        %p301 = scmp.lt.s32.totalorder %s27, 0
        %s302 = scalar_select %p301, %s27, 0
        %s303 = smul.addr %s302, 8
        %s304 = scalar_lea.vmem %s1, %s303
        %s305 = smul.u32 4, %s28
        %s306 = smul.u32 %s28, 4
        %p307 = scmp.eq.s32.totalorder %s28, 0
        // Predicated region
        $region53: #{tpu_custom_call.1} parent=39 // pred_check
          %p308 = pneg %p307
        $region54: #{tpu_custom_call.1} parent=39 // pred_check_branch
          %310 = sbr.rel (%p308) target = $region56
        $region55: #{tpu_custom_call.1} parent=39 // pred_region
          %vm311 = vcmask 261120
          %312 = vst.msk [vmem:[#allocation2] sm:$0xff] %vm311, 0.0
          %313 = vst.msk [vmem:[#allocation2 + $0x8] sm:$0xff] %vm311, 0.0
          %314 = vst.msk [vmem:[#allocation3] sm:$0xff] %vm311, 0.0
          %315 = vst.msk [vmem:[#allocation3 + $0x8] sm:$0xff] %vm311, 0.0
        $region56: #{tpu_custom_call.1} parent=39 // pred_fallthru
          _
        %s316 = sld [smem:[#allocation5 + %s27]]
        %p317 = scmp.lt.s32.totalorder %s306, %s316
        // Predicated region
        $region57: #{tpu_custom_call.1} parent=39 // pred_check
          %p318 = pneg %p317
        $region58: #{tpu_custom_call.1} parent=39 // pred_check_branch
          %320 = sbr.rel (%p318) target = $region60
        $region59: #{tpu_custom_call.1} parent=39 // pred_region
          %v321 = vld [vmem:[%s304] sm:$0xff]
          %v322 = vld [vmem:[#allocation9] sm:$0xff]
          %v323 = vld [vmem:[#allocation9 + $0x8] sm:$0xff]
          %v324 = vld [vmem:[#allocation9 + $0x10] sm:$0xff]
          %v325 = vld [vmem:[#allocation9 + $0x18] sm:$0xff]
          %v326 = vld [vmem:[#allocation11] sm:$0xff]
          %v327 = vld [vmem:[#allocation11 + $0x8] sm:$0xff]
          %v328 = vld [vmem:[#allocation11 + $0x10] sm:$0xff]
          %v329 = vld [vmem:[#allocation11 + $0x18] sm:$0xff]
          %v330 = vld [vmem:[#allocation11 + $0x20] sm:$0xff]
          %v331 = vld [vmem:[#allocation11 + $0x28] sm:$0xff]
          %v332 = vld [vmem:[#allocation11 + $0x30] sm:$0xff]
          %v333 = vld [vmem:[#allocation11 + $0x38] sm:$0xff]
          %v334 = vld [vmem:[%s5] sm:$0x1]
          %v336 = vperm.slane %v334, 0
          %v338 = vld [vmem:[#allocation2] sm:$0xff]
          %v339 = vld [vmem:[#allocation3] sm:$0xff]
          %s340 = scalar_lea.vmem [#allocation2], 8
          %v341 = vld [vmem:[%s340] sm:$0xff]
          %s342 = scalar_lea.vmem [#allocation3], 8
          %v343 = vld [vmem:[%s342] sm:$0xff]
          %v344 = vstv %s306
          %vm345 = vcmp.lt.s32.totalorder %v344, %v321
          %v346 = vsel %vm345, 1, 0
          %347 = vset.pattern.permute.xlu0 0
          %348 = vperm.xlu0 %347, %v346
          %v349 = vpop.permute.xlu0 %348
          %vm350 = vcmp.eq.s32.totalorder %v349, 1
          %v351 = vld [vmem:[%s264] sm:$0xff]
          %vm352 = vcmask 261120
          %v354 = vsel %vm352, %v338, 0
          %356 = vmatpush.msra.mxu0 0.0
          %357 = vmatpush.msra.mxu0 0.0
          %358 = vmatpush.msra.mxu0 0.0
          %359 = vmatpush.msra.mxu0 0.0
          %360 = vmatpush.msra.mxu0 0.0
          %361 = vmatpush.msra.mxu0 0.0
          %362 = vmatpush.msra.mxu0 0.0
          %363 = vmatpush.msra.mxu0 0.0
          %364 = vmatpush.msra.mxu0 0.0
          %365 = vmatpush.msra.mxu0 0.0
          %366 = vmatpush.msra.mxu0 0.0
          %367 = vmatpush.msra.mxu0 0.0
          %368 = vmatpush.msra.mxu0 %v325
          %369 = vmatpush.msra.mxu0 %v324
          %370 = vmatpush.msra.mxu0 %v323
          %371 = vmatpush.msra.mxu0 %v322
          %372 = vmatmul.f32.gmra.mxu0 %v354
          %v373 = vpop.f32.mrf.mxu0
          %v374 = vadd.f32 0.0, %v373
          %375 = vdwg.mxu0
          %v376 = vadd.f32 %v351, %v374
          %v377 = vxor.u32 %v376, 2147483648
          %v378 = vmul.f32 %v377, 1.442695
          %v379 = vpow.pop %v378
          %v380 = vadd.f32 %v379, 1.0
          %v381 = vrcp.pop %v380
          %v382 = vmul.f32 %v380, %v381
          %v383 = vsub.f32 1.0, %v382
          %v384 = vmul.f32 %v381, %v383
          %v385 = vadd.f32 %v381, %v384
          %vm386 = vweird.f32 %v380
          %vm387 = vweird.f32 %v381
          %vm388 = vmor %vm386, %vm387
          %v389 = vsel %vm388, %v381, %v385
          %v390 = vand.u32 2147483647, %v380
          %vm391 = vcmp.eq.f32.partialorder %v390, 8.507059e+37
          %v392 = vand.u32 %v380, 2147483648
          %v393 = vor.u32 1.1754944e-38, %v392
          %v394 = vsel %vm391, %v393, %v389
          %v395 = vmul.f32 1.0, %v394
          %v396 = vtanh.pop %v376
          %398 = vrot.lane.b32.xlu0 %v339, 32
          %v399 = vpop.permute.xlu0 %398
          %v401 = vmul.f32 %v395, %v399
          %403 = vrot.lane.b32.xlu0 %v396, 64
          %v404 = vpop.permute.xlu0 %403
          %v406 = vmul.f32 %v395, %v404
          %408 = vrot.lane.b32.xlu0 %v406, 32
          %v409 = vpop.permute.xlu0 %408
          %v411 = vadd.f32 %v401, %v409
          %v412 = vtanh.pop %v411
          %414 = vrot.lane.b32.xlu0 %v412, 64
          %v415 = vpop.permute.xlu0 %414
          %v417 = vmul.f32 %v395, %v415
          %418 = vrot.lane.b32.xlu0 %v338, 96
          %v419 = vpop.permute.xlu0 %418
          %v421 = vsel %vm350, %v417, %v419
          %v422 = vsel %vm350, %v411, %v399
          %424 = vrot.lane.b32.xlu0 %v421, 32
          %v425 = vpop.permute.xlu0 %424
          %428 = vrot.lane.b32.xlu0 %v341, 32
          %v429 = vpop.permute.xlu0 %428
          %v431 = vsel %vm352, %v425, %v429
          %vm432 = vcmask 523264
          %v434 = vsel %vm432, %v431, 0
          %436 = vmatpush.msra.mxu0 0.0
          %437 = vmatpush.msra.mxu0 0.0
          %438 = vmatpush.msra.mxu0 0.0
          %439 = vmatpush.msra.mxu0 0.0
          %440 = vmatpush.msra.mxu0 0.0
          %441 = vmatpush.msra.mxu0 0.0
          %442 = vmatpush.msra.mxu0 0.0
          %443 = vmatpush.msra.mxu0 0.0
          %444 = vmatpush.msra.mxu0 %v333
          %445 = vmatpush.msra.mxu0 %v332
          %446 = vmatpush.msra.mxu0 %v331
          %447 = vmatpush.msra.mxu0 %v330
          %448 = vmatpush.msra.mxu0 %v329
          %449 = vmatpush.msra.mxu0 %v328
          %450 = vmatpush.msra.mxu0 %v327
          %451 = vmatpush.msra.mxu0 %v326
          %452 = vmatmul.f32.gmra.mxu0 %v434
          %v453 = vpop.f32.mrf.mxu0
          %v454 = vadd.f32 %v336, %v453
          %455 = vdwg.mxu0
          %v456 = vxor.u32 %v454, 2147483648
          %v457 = vmul.f32 %v456, 1.442695
          %v458 = vpow.pop %v457
          %v459 = vadd.f32 %v458, 1.0
          %v460 = vrcp.pop %v459
          %v461 = vmul.f32 %v459, %v460
          %v462 = vsub.f32 1.0, %v461
          %v463 = vmul.f32 %v460, %v462
          %v464 = vadd.f32 %v460, %v463
          %vm465 = vweird.f32 %v459
          %vm466 = vweird.f32 %v460
          %vm467 = vmor %vm465, %vm466
          %v468 = vsel %vm467, %v460, %v464
          %v469 = vand.u32 2147483647, %v459
          %vm470 = vcmp.eq.f32.partialorder %v469, 8.507059e+37
          %v471 = vand.u32 %v459, 2147483648
          %v472 = vor.u32 1.1754944e-38, %v471
          %v473 = vsel %vm470, %v472, %v468
          %v474 = vmul.f32 1.0, %v473
          %v475 = vtanh.pop %v454
          %477 = vrot.lane.b32.xlu0 %v343, 32
          %v478 = vpop.permute.xlu0 %477
          %v480 = vmul.f32 %v474, %v478
          %482 = vrot.lane.b32.xlu0 %v475, 64
          %v483 = vpop.permute.xlu0 %482
          %v485 = vmul.f32 %v474, %v483
          %487 = vrot.lane.b32.xlu0 %v485, 32
          %v488 = vpop.permute.xlu0 %487
          %v490 = vadd.f32 %v480, %v488
          %v491 = vtanh.pop %v490
          %493 = vrot.lane.b32.xlu0 %v491, 64
          %v494 = vpop.permute.xlu0 %493
          %v496 = vmul.f32 %v474, %v494
          %497 = vrot.lane.b32.xlu0 %v341, 96
          %v498 = vpop.permute.xlu0 %497
          %v500 = vsel %vm350, %v496, %v498
          %v501 = vsel %vm350, %v490, %v478
          %s502 = sadd.s32 %s306, 1
          %v503 = vstv %s502
          %vm504 = vcmp.lt.s32.totalorder %v503, %v321
          %v505 = vsel %vm504, 1, 0
          %506 = vset.pattern.permute.xlu0 0
          %507 = vperm.xlu0 %506, %v505
          %v508 = vpop.permute.xlu0 %507
          %vm509 = vcmp.eq.s32.totalorder %v508, 1
          %s510 = scalar_lea.vmem %s264, 8 [#allocation6]
          %v511 = vld [vmem:[%s510] sm:$0xff]
          %v512 = vsel %vm352, %v425, 0
          %514 = vmatpush.msra.mxu0 0.0
          %515 = vmatpush.msra.mxu0 0.0
          %516 = vmatpush.msra.mxu0 0.0
          %517 = vmatpush.msra.mxu0 0.0
          %518 = vmatpush.msra.mxu0 0.0
          %519 = vmatpush.msra.mxu0 0.0
          %520 = vmatpush.msra.mxu0 0.0
          %521 = vmatpush.msra.mxu0 0.0
          %522 = vmatpush.msra.mxu0 0.0
          %523 = vmatpush.msra.mxu0 0.0
          %524 = vmatpush.msra.mxu0 0.0
          %525 = vmatpush.msra.mxu0 0.0
          %526 = vmatpush.msra.mxu0 %v325
          %527 = vmatpush.msra.mxu0 %v324
          %528 = vmatpush.msra.mxu0 %v323
          %529 = vmatpush.msra.mxu0 %v322
          %530 = vmatmul.f32.gmra.mxu0 %v512
          %v531 = vpop.f32.mrf.mxu0
          %v532 = vadd.f32 0.0, %v531
          %533 = vdwg.mxu0
          %v534 = vadd.f32 %v511, %v532
          %v535 = vxor.u32 %v534, 2147483648
          %v536 = vmul.f32 %v535, 1.442695
          %v537 = vpow.pop %v536
          %v538 = vadd.f32 %v537, 1.0
          %v539 = vrcp.pop %v538
          %v540 = vmul.f32 %v538, %v539
          %v541 = vsub.f32 1.0, %v540
          %v542 = vmul.f32 %v539, %v541
          %v543 = vadd.f32 %v539, %v542
          %vm544 = vweird.f32 %v538
          %vm545 = vweird.f32 %v539
          %vm546 = vmor %vm544, %vm545
          %v547 = vsel %vm546, %v539, %v543
          %v548 = vand.u32 2147483647, %v538
          %vm549 = vcmp.eq.f32.partialorder %v548, 8.507059e+37
          %v550 = vand.u32 %v538, 2147483648
          %v551 = vor.u32 1.1754944e-38, %v550
          %v552 = vsel %vm549, %v551, %v547
          %v553 = vmul.f32 1.0, %v552
          %v554 = vtanh.pop %v534
          %v555 = vmul.f32 %v553, %v422
          %557 = vrot.lane.b32.xlu0 %v554, 64
          %v558 = vpop.permute.xlu0 %557
          %v560 = vmul.f32 %v553, %v558
          %562 = vrot.lane.b32.xlu0 %v560, 32
          %v563 = vpop.permute.xlu0 %562
          %v565 = vadd.f32 %v555, %v563
          %v566 = vtanh.pop %v565
          %568 = vrot.lane.b32.xlu0 %v566, 64
          %v569 = vpop.permute.xlu0 %568
          %v571 = vmul.f32 %v553, %v569
          %v572 = vsel %vm509, %v571, %v421
          %v573 = vsel %vm509, %v565, %v422
          %575 = vrot.lane.b32.xlu0 %v572, 32
          %v576 = vpop.permute.xlu0 %575
          %579 = vrot.lane.b32.xlu0 %v500, 64
          %v580 = vpop.permute.xlu0 %579
          %v582 = vsel %vm352, %v576, %v580
          %v584 = vsel %vm432, %v582, 0
          %586 = vmatpush.msra.mxu0 0.0
          %587 = vmatpush.msra.mxu0 0.0
          %588 = vmatpush.msra.mxu0 0.0
          %589 = vmatpush.msra.mxu0 0.0
          %590 = vmatpush.msra.mxu0 0.0
          %591 = vmatpush.msra.mxu0 0.0
          %592 = vmatpush.msra.mxu0 0.0
          %593 = vmatpush.msra.mxu0 0.0
          %594 = vmatpush.msra.mxu0 %v333
          %595 = vmatpush.msra.mxu0 %v332
          %596 = vmatpush.msra.mxu0 %v331
          %597 = vmatpush.msra.mxu0 %v330
          %598 = vmatpush.msra.mxu0 %v329
          %599 = vmatpush.msra.mxu0 %v328
          %600 = vmatpush.msra.mxu0 %v327
          %601 = vmatpush.msra.mxu0 %v326
          %602 = vmatmul.f32.gmra.mxu0 %v584
          %v603 = vpop.f32.mrf.mxu0
          %v604 = vadd.f32 %v336, %v603
          %605 = vdwg.mxu0
          %v606 = vxor.u32 %v604, 2147483648
          %v607 = vmul.f32 %v606, 1.442695
          %v608 = vpow.pop %v607
          %v609 = vadd.f32 %v608, 1.0
          %v610 = vrcp.pop %v609
          %v611 = vmul.f32 %v609, %v610
          %v612 = vsub.f32 1.0, %v611
          %v613 = vmul.f32 %v610, %v612
          %v614 = vadd.f32 %v610, %v613
          %vm615 = vweird.f32 %v609
          %vm616 = vweird.f32 %v610
          %vm617 = vmor %vm615, %vm616
          %v618 = vsel %vm617, %v610, %v614
          %v619 = vand.u32 2147483647, %v609
          %vm620 = vcmp.eq.f32.partialorder %v619, 8.507059e+37
          %v621 = vand.u32 %v609, 2147483648
          %v622 = vor.u32 1.1754944e-38, %v621
          %v623 = vsel %vm620, %v622, %v618
          %v624 = vmul.f32 1.0, %v623
          %v625 = vtanh.pop %v604
          %v626 = vmul.f32 %v624, %v501
          %628 = vrot.lane.b32.xlu0 %v625, 64
          %v629 = vpop.permute.xlu0 %628
          %v631 = vmul.f32 %v624, %v629
          %633 = vrot.lane.b32.xlu0 %v631, 32
          %v634 = vpop.permute.xlu0 %633
          %v636 = vadd.f32 %v626, %v634
          %v637 = vtanh.pop %v636
          %639 = vrot.lane.b32.xlu0 %v637, 64
          %v640 = vpop.permute.xlu0 %639
          %v642 = vmul.f32 %v624, %v640
          %v643 = vsel %vm509, %v642, %v500
          %v644 = vsel %vm509, %v636, %v501
          %s645 = sadd.s32 %s306, 2
          %v646 = vstv %s645
          %vm647 = vcmp.lt.s32.totalorder %v646, %v321
          %v648 = vsel %vm647, 1, 0
          %649 = vset.pattern.permute.xlu0 0
          %650 = vperm.xlu0 %649, %v648
          %v651 = vpop.permute.xlu0 %650
          %vm652 = vcmp.eq.s32.totalorder %v651, 1
          %s653 = scalar_lea.vmem %s264, 16 [#allocation6]
          %v654 = vld [vmem:[%s653] sm:$0xff]
          %v655 = vsel %vm352, %v576, 0
          %657 = vmatpush.msra.mxu0 0.0
          %658 = vmatpush.msra.mxu0 0.0
          %659 = vmatpush.msra.mxu0 0.0
          %660 = vmatpush.msra.mxu0 0.0
          %661 = vmatpush.msra.mxu0 0.0
          %662 = vmatpush.msra.mxu0 0.0
          %663 = vmatpush.msra.mxu0 0.0
          %664 = vmatpush.msra.mxu0 0.0
          %665 = vmatpush.msra.mxu0 0.0
          %666 = vmatpush.msra.mxu0 0.0
          %667 = vmatpush.msra.mxu0 0.0
          %668 = vmatpush.msra.mxu0 0.0
          %669 = vmatpush.msra.mxu0 %v325
          %670 = vmatpush.msra.mxu0 %v324
          %671 = vmatpush.msra.mxu0 %v323
          %672 = vmatpush.msra.mxu0 %v322
          %673 = vmatmul.f32.gmra.mxu0 %v655
          %v674 = vpop.f32.mrf.mxu0
          %v675 = vadd.f32 0.0, %v674
          %676 = vdwg.mxu0
          %v677 = vadd.f32 %v654, %v675
          %v678 = vxor.u32 %v677, 2147483648
          %v679 = vmul.f32 %v678, 1.442695
          %v680 = vpow.pop %v679
          %v681 = vadd.f32 %v680, 1.0
          %v682 = vrcp.pop %v681
          %v683 = vmul.f32 %v681, %v682
          %v684 = vsub.f32 1.0, %v683
          %v685 = vmul.f32 %v682, %v684
          %v686 = vadd.f32 %v682, %v685
          %vm687 = vweird.f32 %v681
          %vm688 = vweird.f32 %v682
          %vm689 = vmor %vm687, %vm688
          %v690 = vsel %vm689, %v682, %v686
          %v691 = vand.u32 2147483647, %v681
          %vm692 = vcmp.eq.f32.partialorder %v691, 8.507059e+37
          %v693 = vand.u32 %v681, 2147483648
          %v694 = vor.u32 1.1754944e-38, %v693
          %v695 = vsel %vm692, %v694, %v690
          %v696 = vmul.f32 1.0, %v695
          %v697 = vtanh.pop %v677
          %v698 = vmul.f32 %v696, %v573
          %700 = vrot.lane.b32.xlu0 %v697, 64
          %v701 = vpop.permute.xlu0 %700
          %v703 = vmul.f32 %v696, %v701
          %705 = vrot.lane.b32.xlu0 %v703, 32
          %v706 = vpop.permute.xlu0 %705
          %v708 = vadd.f32 %v698, %v706
          %v709 = vtanh.pop %v708
          %711 = vrot.lane.b32.xlu0 %v709, 64
          %v712 = vpop.permute.xlu0 %711
          %v714 = vmul.f32 %v696, %v712
          %v715 = vsel %vm652, %v714, %v572
          %v716 = vsel %vm652, %v708, %v573
          %718 = vrot.lane.b32.xlu0 %v715, 32
          %v719 = vpop.permute.xlu0 %718
          %722 = vrot.lane.b32.xlu0 %v643, 64
          %v723 = vpop.permute.xlu0 %722
          %v725 = vsel %vm352, %v719, %v723
          %v727 = vsel %vm432, %v725, 0
          %729 = vmatpush.msra.mxu0 0.0
          %730 = vmatpush.msra.mxu0 0.0
          %731 = vmatpush.msra.mxu0 0.0
          %732 = vmatpush.msra.mxu0 0.0
          %733 = vmatpush.msra.mxu0 0.0
          %734 = vmatpush.msra.mxu0 0.0
          %735 = vmatpush.msra.mxu0 0.0
          %736 = vmatpush.msra.mxu0 0.0
          %737 = vmatpush.msra.mxu0 %v333
          %738 = vmatpush.msra.mxu0 %v332
          %739 = vmatpush.msra.mxu0 %v331
          %740 = vmatpush.msra.mxu0 %v330
          %741 = vmatpush.msra.mxu0 %v329
          %742 = vmatpush.msra.mxu0 %v328
          %743 = vmatpush.msra.mxu0 %v327
          %744 = vmatpush.msra.mxu0 %v326
          %745 = vmatmul.f32.gmra.mxu0 %v727
          %v746 = vpop.f32.mrf.mxu0
          %v747 = vadd.f32 %v336, %v746
          %748 = vdwg.mxu0
          %v749 = vxor.u32 %v747, 2147483648
          %v750 = vmul.f32 %v749, 1.442695
          %v751 = vpow.pop %v750
          %v752 = vadd.f32 %v751, 1.0
          %v753 = vrcp.pop %v752
          %v754 = vmul.f32 %v752, %v753
          %v755 = vsub.f32 1.0, %v754
          %v756 = vmul.f32 %v753, %v755
          %v757 = vadd.f32 %v753, %v756
          %vm758 = vweird.f32 %v752
          %vm759 = vweird.f32 %v753
          %vm760 = vmor %vm758, %vm759
          %v761 = vsel %vm760, %v753, %v757
          %v762 = vand.u32 2147483647, %v752
          %vm763 = vcmp.eq.f32.partialorder %v762, 8.507059e+37
          %v764 = vand.u32 %v752, 2147483648
          %v765 = vor.u32 1.1754944e-38, %v764
          %v766 = vsel %vm763, %v765, %v761
          %v767 = vmul.f32 1.0, %v766
          %v768 = vtanh.pop %v747
          %v769 = vmul.f32 %v767, %v644
          %771 = vrot.lane.b32.xlu0 %v768, 64
          %v772 = vpop.permute.xlu0 %771
          %v774 = vmul.f32 %v767, %v772
          %776 = vrot.lane.b32.xlu0 %v774, 32
          %v777 = vpop.permute.xlu0 %776
          %v779 = vadd.f32 %v769, %v777
          %v780 = vtanh.pop %v779
          %782 = vrot.lane.b32.xlu0 %v780, 64
          %v783 = vpop.permute.xlu0 %782
          %v785 = vmul.f32 %v767, %v783
          %v786 = vsel %vm652, %v785, %v643
          %v787 = vsel %vm652, %v779, %v644
          %s788 = sadd.s32 %s306, 3
          %v789 = vstv %s788
          %vm790 = vcmp.lt.s32.totalorder %v789, %v321
          %v791 = vsel %vm790, 1, 0
          %792 = vset.pattern.permute.xlu0 0
          %793 = vperm.xlu0 %792, %v791
          %v794 = vpop.permute.xlu0 %793
          %vm795 = vcmp.eq.s32.totalorder %v794, 1
          %s796 = scalar_lea.vmem %s264, 24 [#allocation6]
          %v797 = vld [vmem:[%s796] sm:$0xff]
          %v798 = vsel %vm352, %v719, 0
          %800 = vmatpush.msra.mxu0 0.0
          %801 = vmatpush.msra.mxu0 0.0
          %802 = vmatpush.msra.mxu0 0.0
          %803 = vmatpush.msra.mxu0 0.0
          %804 = vmatpush.msra.mxu0 0.0
          %805 = vmatpush.msra.mxu0 0.0
          %806 = vmatpush.msra.mxu0 0.0
          %807 = vmatpush.msra.mxu0 0.0
          %808 = vmatpush.msra.mxu0 0.0
          %809 = vmatpush.msra.mxu0 0.0
          %810 = vmatpush.msra.mxu0 0.0
          %811 = vmatpush.msra.mxu0 0.0
          %812 = vmatpush.msra.mxu0 %v325
          %813 = vmatpush.msra.mxu0 %v324
          %814 = vmatpush.msra.mxu0 %v323
          %815 = vmatpush.msra.mxu0 %v322
          %816 = vmatmul.f32.gmra.mxu0 %v798
          %v817 = vpop.f32.mrf.mxu0
          %v818 = vadd.f32 0.0, %v817
          %819 = vdwg.mxu0
          %v820 = vadd.f32 %v797, %v818
          %v821 = vxor.u32 %v820, 2147483648
          %v822 = vmul.f32 %v821, 1.442695
          %v823 = vpow.pop %v822
          %v824 = vadd.f32 %v823, 1.0
          %v825 = vrcp.pop %v824
          %v826 = vmul.f32 %v824, %v825
          %v827 = vsub.f32 1.0, %v826
          %v828 = vmul.f32 %v825, %v827
          %v829 = vadd.f32 %v825, %v828
          %vm830 = vweird.f32 %v824
          %vm831 = vweird.f32 %v825
          %vm832 = vmor %vm830, %vm831
          %v833 = vsel %vm832, %v825, %v829
          %v834 = vand.u32 2147483647, %v824
          %vm835 = vcmp.eq.f32.partialorder %v834, 8.507059e+37
          %v836 = vand.u32 %v824, 2147483648
          %v837 = vor.u32 1.1754944e-38, %v836
          %v838 = vsel %vm835, %v837, %v833
          %v839 = vmul.f32 1.0, %v838
          %v840 = vtanh.pop %v820
          %v841 = vmul.f32 %v839, %v716
          %843 = vrot.lane.b32.xlu0 %v840, 64
          %v844 = vpop.permute.xlu0 %843
          %v846 = vmul.f32 %v839, %v844
          %848 = vrot.lane.b32.xlu0 %v846, 32
          %v849 = vpop.permute.xlu0 %848
          %v851 = vadd.f32 %v841, %v849
          %v852 = vtanh.pop %v851
          %854 = vrot.lane.b32.xlu0 %v852, 64
          %v855 = vpop.permute.xlu0 %854
          %v857 = vmul.f32 %v839, %v855
          %v858 = vsel %vm795, %v857, %v715
          %v859 = vsel %vm795, %v851, %v716
          %861 = vrot.lane.b32.xlu0 %v858, 32
          %v862 = vpop.permute.xlu0 %861
          %865 = vrot.lane.b32.xlu0 %v786, 64
          %v866 = vpop.permute.xlu0 %865
          %v868 = vsel %vm352, %v862, %v866
          %v870 = vsel %vm432, %v868, 0
          %872 = vmatpush.msra.mxu0 0.0
          %873 = vmatpush.msra.mxu0 0.0
          %874 = vmatpush.msra.mxu0 0.0
          %875 = vmatpush.msra.mxu0 0.0
          %876 = vmatpush.msra.mxu0 0.0
          %877 = vmatpush.msra.mxu0 0.0
          %878 = vmatpush.msra.mxu0 0.0
          %879 = vmatpush.msra.mxu0 0.0
          %880 = vmatpush.msra.mxu0 %v333
          %881 = vmatpush.msra.mxu0 %v332
          %882 = vmatpush.msra.mxu0 %v331
          %883 = vmatpush.msra.mxu0 %v330
          %884 = vmatpush.msra.mxu0 %v329
          %885 = vmatpush.msra.mxu0 %v328
          %886 = vmatpush.msra.mxu0 %v327
          %887 = vmatpush.msra.mxu0 %v326
          %888 = vmatmul.f32.gmra.mxu0 %v870
          %v889 = vpop.f32.mrf.mxu0
          %v890 = vadd.f32 %v336, %v889
          %891 = vdwg.mxu0
          %v892 = vxor.u32 %v890, 2147483648
          %v893 = vmul.f32 %v892, 1.442695
          %v894 = vpow.pop %v893
          %v895 = vadd.f32 %v894, 1.0
          %v896 = vrcp.pop %v895
          %v897 = vmul.f32 %v895, %v896
          %v898 = vsub.f32 1.0, %v897
          %v899 = vmul.f32 %v896, %v898
          %v900 = vadd.f32 %v896, %v899
          %vm901 = vweird.f32 %v895
          %vm902 = vweird.f32 %v896
          %vm903 = vmor %vm901, %vm902
          %v904 = vsel %vm903, %v896, %v900
          %v905 = vand.u32 2147483647, %v895
          %vm906 = vcmp.eq.f32.partialorder %v905, 8.507059e+37
          %v907 = vand.u32 %v895, 2147483648
          %v908 = vor.u32 1.1754944e-38, %v907
          %v909 = vsel %vm906, %v908, %v904
          %v910 = vmul.f32 1.0, %v909
          %v911 = vtanh.pop %v890
          %v912 = vmul.f32 %v910, %v787
          %914 = vrot.lane.b32.xlu0 %v911, 64
          %v915 = vpop.permute.xlu0 %914
          %v917 = vmul.f32 %v910, %v915
          %919 = vrot.lane.b32.xlu0 %v917, 32
          %v920 = vpop.permute.xlu0 %919
          %v922 = vadd.f32 %v912, %v920
          %v923 = vtanh.pop %v922
          %925 = vrot.lane.b32.xlu0 %v923, 64
          %v926 = vpop.permute.xlu0 %925
          %v928 = vmul.f32 %v910, %v926
          %v929 = vsel %vm795, %v928, %v786
          %v930 = vsel %vm795, %v922, %v787
          %931 = vst.msk [vmem:[#allocation2] sm:$0xff] %vm352, %v862
          %933 = vrot.lane.b32.xlu0 %v859, 96
          %v934 = vpop.permute.xlu0 %933
          %936 = vst.msk [vmem:[#allocation3] sm:$0xff] %vm352, %v934
          %938 = vrot.lane.b32.xlu0 %v929, 32
          %v939 = vpop.permute.xlu0 %938
          %941 = vst.msk [vmem:[%s340] sm:$0xff] %vm352, %v939
          %943 = vrot.lane.b32.xlu0 %v930, 96
          %v944 = vpop.permute.xlu0 %943
          %946 = vst.msk [vmem:[%s342] sm:$0xff] %vm352, %v944
        $region60: #{tpu_custom_call.1} parent=39 // pred_fallthru
          _
        %p947 = scmp.eq.s32.totalorder %s28, 1
        // Predicated region
        $region61: #{tpu_custom_call.1} parent=39 // pred_check
          %p948 = pneg %p947
        $region62: #{tpu_custom_call.1} parent=39 // pred_check_branch
          %950 = sbr.rel (%p948) target = $region64
        $region63: #{tpu_custom_call.1} parent=39 // pred_region
          %v951 = vld [vmem:[#allocation2] sm:$0xff]
          %v952 = vld [vmem:[#allocation2 + $0x8] sm:$0xff]
          %vm953 = vcmask 261120
          %954 = vst.msk [vmem:[#allocation12] sm:$0xff] %vm953, %v951
          %955 = vst.msk [vmem:[#allocation12 + $0x8] sm:$0xff] %vm953, %v952
        $region64: #{tpu_custom_call.1} parent=39 // pred_fallthru
          _
        // Predicated region
        $region65: #{tpu_custom_call.1} parent=39 // pred_check
          %p956 = pneg %p170
        $region66: #{tpu_custom_call.1} parent=39 // pred_check_branch
          %958 = sbr.rel (%p956) target = $region68
        $region67: #{tpu_custom_call.1} parent=39 // pred_region
          %960 = vsyncadd [#allocation8], 0
          %s961 = smul.addr %s27, 8
          %s962 = scalar_lea.hbm %s6, %s961
          %s963 = sshll.u32 [#allocation12], 4
          %s964 = int_to_ptr.vmem [resolvable:$true] %s963
          %s965 = sshll.u32 %s962, 4
          %s966 = int_to_ptr.hbm [resolvable:$true] %s965
          %971 = dma.vmem_to_hbm [thread:$0]  %s964, 256, %s966, [#allocation8], 128, 128, 8
        $region68: #{tpu_custom_call.1} parent=39 // pred_fallthru
          _
        // Predicated region
        $region69: #{tpu_custom_call.1} parent=39 // pred_check
          %p972 = pneg %p170
        $region70: #{tpu_custom_call.1} parent=39 // pred_check_branch
          %974 = sbr.rel (%p972) target = $region72
        $region71: #{tpu_custom_call.1} parent=39 // pred_region
          %976 = dma.done [#allocation8], 256
        $region72: #{tpu_custom_call.1} parent=39 // pred_fallthru
          _
      $region40: #{tpu_custom_call.1} parent=5 // pred_fallthru
        _
      %p977 = scmp.le.s32.totalorder 2, %s18
      // Predicated region
      $region73: #{tpu_custom_call.1} parent=5 // pred_check
        %p978 = pneg %p977
      $region74: #{tpu_custom_call.1} parent=5 // pred_check_branch
        %980 = sbr.rel (%p978) target = $region76
      $region75: #{tpu_custom_call.1} parent=5 // pred_region
        %s981 = ssub.s32 %s18, 2
      $region76: #{tpu_custom_call.1} parent=5 // pred_fallthru
        _
    $region6: #{tpu_custom_call.1} parent=1 // loop_footer
      %s22 = sadd.s32 1, %s18
    $region7: #{tpu_custom_call.1} parent=1 // loop_footer_branch
      %17 = sbr.rel target = $region3
    $region8: #{tpu_custom_call.1} parent=1 // loop_exit
      _
    %982 = vsyncpa [#allocation7], 1
    %s983 = scalar_lea.sflag [#allocation7], 1
    %984 = vsyncpa %s983, 1
    %985 = vsyncpa [#allocation10], 1
    %986 = vsyncpa [#allocation8], 1
    %s987 = scalar_lea.sflag [#allocation8], 1
    %988 = vsyncpa %s987, 1

</llo_original>
